<compile_context>
chip_gen: v6e
topology: v6e:2x2x1
jax: 0.10.0
libtpu: 0.0.40
codegen_flags: <defaults>
</compile_context>

<pallas_src>
import jax
import jax.numpy as jnp
from jax import lax
from jax.experimental import pallas as pl
from jax.experimental.pallas import tpu as pltpu

_MIB = 1024 * 1024


def _round_up(x, m):
    return ((x + m - 1) // m) * m


def _choose_row_tile(M, tm_req, sublane=16):
    """Row tile that (a) divides M exactly (no pad/slice HBM copies), (b) is a
    multiple of `sublane` (16 covers f32 and bf16 packing), and (c) leaves at
    least 2 grid steps so v7x's two TensorCores both get work.  Falls back to
    padding only when M has no suitable divisor."""
    if M >= 2 * sublane:
        upper = min(tm_req, M // 2)
    else:
        upper = min(tm_req, max(M, sublane))
    upper = max(sublane, (upper // sublane) * sublane)
    for cand in range(upper, sublane - 1, -sublane):
        if M % cand == 0:
            return cand, M                       # exact fit, no padding
    tm_eff = min(tm_req, _round_up(M, sublane))
    return tm_eff, _round_up(M, tm_eff)          # fallback: pad ragged tail


def _choose_hidden_chunk(hidden, tn_req=512):
    """Hidden-axis chunk size: bounds the live (tm, tn) f32 intermediate.
    Multiples of 256 keep the MXU contraction full on v6e/v7x."""
    if hidden <= tn_req:
        return hidden
    start = (min(tn_req, hidden) // 256) * 256
    for cand in range(start, 255, -256):
        if hidden % cand == 0:
            return cand
    return hidden                                # no clean divisor: keep whole


def _vmem_limit_bytes(required):
    """Derived scoped-VMEM limit, clipped to the part's actual capacity."""
    try:
        cap = int(pltpu.get_tpu_info().vmem_capacity_bytes)
    except Exception:
        cap = 64 * _MIB                          # conservative: v7x per-TC
    limit = max(required + 4 * _MIB, 32 * _MIB)
    return int(min(limit, int(cap * 0.9)))


def _ffn_kernel(x_ref, w1_ref, b1_ref, w2_ref, b2_ref, o_ref, acc_ref):
    # Per grid step:
    #   x_ref  : (tm, dim)             activations (stored dtype)
    #   w1_ref : (n_chunks, dim, tn)   bf16, hidden axis pre-chunked
    #   b1_ref : (n_chunks, 1, tn)     f32
    #   w2_ref : (n_chunks, tn, dim)   bf16
    #   b2_ref : (1, dim)              f32
    #   o_ref  : (tm, dim)
    #   acc_ref: (tm, dim)             f32 scratch (second-matmul accumulator)
    n_chunks = w1_ref.shape[0]
    acc_ref[...] = jnp.zeros_like(acc_ref)
    x = x_ref[...].astype(w1_ref.dtype)          # VPU cast -> bf16 MXU inputs

    def body(c, carry):
        # First matmul: full contraction over dim, hidden chunk c (width tn).
        h = jnp.dot(x, w1_ref[c], preferred_element_type=jnp.float32)
        h = jnp.maximum(h + b1_ref[c], 0.0)      # bias + ReLU on f32 accumulator
        # TODO(synk): dropout p=0.0 is an identity; for p>0 mask `h` here with
        # pltpu.prng_seed / pltpu.prng_random_bits.
        acc_ref[...] += jnp.dot(h.astype(w2_ref.dtype), w2_ref[c],
                                preferred_element_type=jnp.float32)
        return carry

    lax.fori_loop(0, n_chunks, body, 0)
    o_ref[...] = (acc_ref[...] + b2_ref[...]).astype(o_ref.dtype)


def feed_forward(x, w1, b1, w2, b2, *, tm=256, tn=512,
                 compute_dtype=jnp.bfloat16):
    """ViT FeedForward: Linear(dim->hidden) -> ReLU -> Linear(hidden->dim).

    x: (B, S, dim).  w1: (dim, hidden), w2: (hidden, dim) — (in, out) layout,
    i.e. transposed from PyTorch's (out, in).  Returns (B, S, dim) in x.dtype.
    Matmuls run in `compute_dtype` (bf16 by default) with f32 accumulation."""
    B, S, dim = x.shape
    hidden = w1.shape[1]
    M = B * S

    tm_eff, M_pad = _choose_row_tile(M, tm)
    tn_eff = _choose_hidden_chunk(hidden, tn)
    n_chunks = hidden // tn_eff

    x2d = x.reshape(M, dim)
    if M_pad != M:                               # rare fallback path
        x2d = jnp.pad(x2d, ((0, M_pad - M), (0, 0)))

    cdt = jnp.dtype(compute_dtype)
    # Cast weights to the MXU dtype once and pre-chunk the hidden axis so the
    # kernel only needs leading-axis indexing.
    w1c = w1.astype(cdt).reshape(dim, n_chunks, tn_eff).transpose(1, 0, 2)
    w2c = w2.astype(cdt).reshape(n_chunks, tn_eff, dim)
    b1c = b1.astype(jnp.float32).reshape(n_chunks, 1, tn_eff)
    b2c = b2.astype(jnp.float32).reshape(1, dim)

    grid = (M_pad // tm_eff,)

    x_item = jnp.dtype(x.dtype).itemsize
    # VMEM budget: double-buffered token tiles, two pipeline buffers for the
    # (grid-invariant) weights, f32 accumulator scratch, live f32 hidden chunk.
    vmem_needed = (
        2 * tm_eff * dim * x_item                       # x tiles
        + 2 * tm_eff * dim * x_item                     # out tiles
        + 2 * (w1c.size + w2c.size) * cdt.itemsize      # weights
        + 2 * (n_chunks * 8 * tn_eff + 8 * dim) * 4     # biases (sublane pad)
        + tm_eff * dim * 4                              # f32 accumulator
        + 2 * tm_eff * tn_eff * 4                       # live f32 chunk `h`
    )

    cost = pl.CostEstimate(
        flops=4 * M_pad * dim * hidden,                 # two matmuls
        transcendentals=0,
        bytes_accessed=(x2d.size * x_item + M_pad * dim * x_item
                        + (w1c.size + w2c.size) * cdt.itemsize
                        + (b1c.size + b2c.size) * 4),
    )

    out2d = pl.pallas_call(
        _ffn_kernel,
        out_shape=jax.ShapeDtypeStruct((M_pad, dim), x.dtype),
        grid_spec=pltpu.PrefetchScalarGridSpec(
            num_scalar_prefetch=0,
            grid=grid,
            in_specs=[
                # Streamed token tile (double buffered by default).
                pl.BlockSpec((tm_eff, dim), lambda i: (i, 0)),
                # Grid-invariant weights / biases: constant index_map, so they
                # are DMA'd from HBM once and stay VMEM-resident (never
                # re-streamed per row tile).
                pl.BlockSpec((n_chunks, dim, tn_eff), lambda i: (0, 0, 0)),
                pl.BlockSpec((n_chunks, 1, tn_eff), lambda i: (0, 0, 0)),
                pl.BlockSpec((n_chunks, tn_eff, dim), lambda i: (0, 0, 0)),
                pl.BlockSpec((1, dim), lambda i: (0, 0)),
            ],
            out_specs=pl.BlockSpec((tm_eff, dim), lambda i: (i, 0)),
            scratch_shapes=[pltpu.VMEM((tm_eff, dim), jnp.float32)],
        ),
        compiler_params=pltpu.CompilerParams(
            dimension_semantics=("parallel",),          # megacore on v7x
            vmem_limit_bytes=_vmem_limit_bytes(vmem_needed),
        ),
        cost_estimate=cost,
    )(x2d, w1c, b1c, w2c, b2c)

    if M_pad != M:
        out2d = out2d[:M]
    return out2d.reshape(B, S, dim)


def feed_forward_ref(x, w1, b1, w2, b2, compute_dtype=jnp.bfloat16):
    """Pure-JAX reference following the same precision recipe as the kernel
    (compute_dtype matmul inputs, f32 accumulation)."""
    cdt = jnp.dtype(compute_dtype)
    h = jnp.einsum("bsd,dh->bsh", x.astype(cdt), w1.astype(cdt),
                   preferred_element_type=jnp.float32)
    h = jnp.maximum(h + b1.astype(jnp.float32), 0.0)
    y = jnp.einsum("bsh,hd->bsd", h.astype(cdt), w2.astype(cdt),
                   preferred_element_type=jnp.float32)
    return (y + b2.astype(jnp.float32)).astype(x.dtype)


if __name__ == "__main__":
    # Small but MXU-friendly demo shapes: dim / hidden are multiples of 256
    # (full contraction width on v6e/v7x) and B*S = 256 splits into two
    # 128-row tiles, so both v7x TensorCores get work and no padding is needed.
    B, S, dim, hidden = 2, 128, 256, 512

    key = jax.random.PRNGKey(0)
    kx, k1, kb1, k2, kb2 = jax.random.split(key, 5)

    x = jax.random.normal(kx, (B, S, dim), dtype=jnp.float32)

    # PyTorch nn.Linear-style init: U(-1/sqrt(fan_in), 1/sqrt(fan_in)).
    lim1 = 1.0 / float(dim) ** 0.5
    w1 = jax.random.uniform(k1, (dim, hidden), minval=-lim1, maxval=lim1,
                            dtype=jnp.float32)
    b1 = jax.random.uniform(kb1, (hidden,), minval=-lim1, maxval=lim1,
                            dtype=jnp.float32)
    lim2 = 1.0 / float(hidden) ** 0.5
    w2 = jax.random.uniform(k2, (hidden, dim), minval=-lim2, maxval=lim2,
                            dtype=jnp.float32)
    b2 = jax.random.uniform(kb2, (dim,), minval=-lim2, maxval=lim2,
                            dtype=jnp.float32)

    out = feed_forward(x, w1, b1, w2, b2)
    out = jax.block_until_ready(out)
    assert out.shape == (B, S, dim) and out.dtype == x.dtype

    # Check against a reference using the same bf16-input / f32-accumulate
    # recipe as the kernel.
    ref = feed_forward_ref(x, w1, b1, w2, b2)
    err = float(jnp.max(jnp.abs(out - ref)))
    assert jnp.allclose(out, ref, atol=1e-2, rtol=1e-2), f"max abs err {err}"

    # Loose sanity check against full-f32 math (difference = bf16 rounding).
    ref_f32 = feed_forward_ref(x, w1, b1, w2, b2, compute_dtype=jnp.float32)
    err32 = float(jnp.max(jnp.abs(out - ref_f32)))
    assert jnp.allclose(out, ref_f32, atol=7.5e-2, rtol=7.5e-2), \
        f"f32 max abs err {err32}"

    print("KERNEL_OK")
</pallas_src>

<mosaic_0001>
module attributes {stable_mosaic.version = 11 : i64} {
  func.func @_ffn_kernel(%arg0: i32, %arg1: memref<128x256xf32, #tpu.memory_space<vmem>>, %arg2: memref<1x256x512xbf16, #tpu.memory_space<vmem>>, %arg3: memref<1x1x512xf32, #tpu.memory_space<vmem>>, %arg4: memref<1x512x256xbf16, #tpu.memory_space<vmem>>, %arg5: memref<1x256xf32, #tpu.memory_space<vmem>>, %arg6: memref<128x256xf32, #tpu.memory_space<vmem>>, %arg7: memref<128x256xf32, #tpu.memory_space<vmem>>) attributes {dimension_semantics = [#tpu.dimension_semantics<parallel>], iteration_bounds = array<i64: 2>, scalar_prefetch = 0 : i64, scratch_operands = 1 : i64, tpu.core_type = #tpu.core_type<tc>, window_params = [{transform_indices = @transform_0, window_bounds = array<i64: 128, 256>}, {pipeline_mode = #tpu.pipeline_mode<synchronous>, transform_indices = @transform_1, window_bounds = array<i64: 1, 256, 512>}, {pipeline_mode = #tpu.pipeline_mode<synchronous>, transform_indices = @transform_2, window_bounds = array<i64: 1, 1, 512>}, {pipeline_mode = #tpu.pipeline_mode<synchronous>, transform_indices = @transform_3, window_bounds = array<i64: 1, 512, 256>}, {pipeline_mode = #tpu.pipeline_mode<synchronous>, transform_indices = @transform_4, window_bounds = array<i64: 1, 256>}, {transform_indices = @transform_5, window_bounds = array<i64: 128, 256>}]} {
    %cst = arith.constant 0.000000e+00 : f32
    %0 = vector.broadcast %cst : f32 to vector<128x256xf32>
    %c0 = arith.constant 0 : index
    %c0_0 = arith.constant 0 : index
    %1 = vector.load %arg7[%c0, %c0_0] : memref<128x256xf32, #tpu.memory_space<vmem>>, vector<128x256xf32>
    tpu.vector_store %arg7[%c0, %c0_0], %0 {strides = array<i32>} : memref<128x256xf32, #tpu.memory_space<vmem>>, vector<128x256xf32>,
    %c0_1 = arith.constant 0 : index
    %c0_2 = arith.constant 0 : index
    %2 = vector.load %arg1[%c0_1, %c0_2] : memref<128x256xf32, #tpu.memory_space<vmem>>, vector<128x256xf32>
    %3 = arith.truncf %2 : vector<128x256xf32> to vector<128x256xbf16>
    %c0_i32 = arith.constant 0 : i32
    %4 = arith.index_cast %c0_i32 : i32 to index
    %c0_3 = arith.constant 0 : index
    %c0_4 = arith.constant 0 : index
    %5 = vector.load %arg2[%4, %c0_3, %c0_4] : memref<1x256x512xbf16, #tpu.memory_space<vmem>>, vector<1x256x512xbf16>
    %6 = vector.shape_cast %5 : vector<1x256x512xbf16> to vector<256x512xbf16>
    %cst_5 = arith.constant dense<0.000000e+00> : vector<128x512xf32>
    %7 = tpu.matmul %3, %6, %cst_5 {dimension_numbers = #tpu.dot_dimension_numbers<[1], [0], [0], [1], [0, 0, 1, 1], [], []>} : vector<128x256xbf16>, vector<256x512xbf16>, vector<128x512xf32> -> vector<128x512xf32>
    %8 = arith.index_cast %c0_i32 : i32 to index
    %c0_6 = arith.constant 0 : index
    %c0_7 = arith.constant 0 : index
    %9 = vector.load %arg3[%8, %c0_6, %c0_7] : memref<1x1x512xf32, #tpu.memory_space<vmem>>, vector<1x1x512xf32>
    %10 = vector.shape_cast %9 : vector<1x1x512xf32> to vector<1x512xf32>
    %11 = vector.broadcast %10 : vector<1x512xf32> to vector<128x512xf32>
    %12 = arith.addf %7, %11 : vector<128x512xf32>
    %cst_8 = arith.constant 0.000000e+00 : f32
    %13 = vector.broadcast %cst_8 : f32 to vector<128x512xf32>
    %14 = arith.maximumf %12, %13 : vector<128x512xf32>
    %c0_9 = arith.constant 0 : index
    %c0_10 = arith.constant 0 : index
    %15 = vector.load %arg7[%c0_9, %c0_10] : memref<128x256xf32, #tpu.memory_space<vmem>>, vector<128x256xf32>
    %16 = arith.truncf %14 : vector<128x512xf32> to vector<128x512xbf16>
    %17 = arith.index_cast %c0_i32 : i32 to index
    %c0_11 = arith.constant 0 : index
    %c0_12 = arith.constant 0 : index
    %18 = vector.load %arg4[%17, %c0_11, %c0_12] : memref<1x512x256xbf16, #tpu.memory_space<vmem>>, vector<1x512x256xbf16>
    %19 = vector.shape_cast %18 : vector<1x512x256xbf16> to vector<512x256xbf16>
    %cst_13 = arith.constant dense<0.000000e+00> : vector<128x256xf32>
    %20 = tpu.matmul %16, %19, %cst_13 {dimension_numbers = #tpu.dot_dimension_numbers<[1], [0], [0], [1], [0, 0, 1, 1], [], []>} : vector<128x512xbf16>, vector<512x256xbf16>, vector<128x256xf32> -> vector<128x256xf32>
    %21 = arith.addf %15, %20 : vector<128x256xf32>
    %c0_14 = arith.constant 0 : index
    %c0_15 = arith.constant 0 : index
    %22 = vector.load %arg7[%c0_14, %c0_15] : memref<128x256xf32, #tpu.memory_space<vmem>>, vector<128x256xf32>
    tpu.vector_store %arg7[%c0_14, %c0_15], %21 {strides = array<i32>} : memref<128x256xf32, #tpu.memory_space<vmem>>, vector<128x256xf32>,
    %c1_i32 = arith.constant 1 : i32
    %c0_16 = arith.constant 0 : index
    %c0_17 = arith.constant 0 : index
    %23 = vector.load %arg7[%c0_16, %c0_17] : memref<128x256xf32, #tpu.memory_space<vmem>>, vector<128x256xf32>
    %c0_18 = arith.constant 0 : index
    %c0_19 = arith.constant 0 : index
    %24 = vector.load %arg5[%c0_18, %c0_19] : memref<1x256xf32, #tpu.memory_space<vmem>>, vector<1x256xf32>
    %25 = vector.broadcast %24 : vector<1x256xf32> to vector<128x256xf32>
    %26 = arith.addf %23, %25 : vector<128x256xf32>
    %c0_20 = arith.constant 0 : index
    %c0_21 = arith.constant 0 : index
    %27 = vector.load %arg6[%c0_20, %c0_21] : memref<128x256xf32, #tpu.memory_space<vmem>>, vector<128x256xf32>
    tpu.vector_store %arg6[%c0_20, %c0_21], %26 {strides = array<i32>} : memref<128x256xf32, #tpu.memory_space<vmem>>, vector<128x256xf32>,
    return
  }
  func.func @transform_0(%arg0: i32) -> (i32, i32) {
    %c0_i32 = arith.constant 0 : i32
    %c0_i32_0 = arith.constant 0 : i32
    return %arg0, %c0_i32 : i32, i32
  }
  func.func @transform_1(%arg0: i32) -> (i32, i32, i32) {
    %c0_i32 = arith.constant 0 : i32
    %c0_i32_0 = arith.constant 0 : i32
    %c0_i32_1 = arith.constant 0 : i32
    %c0_i32_2 = arith.constant 0 : i32
    return %c0_i32, %c0_i32_0, %c0_i32_1 : i32, i32, i32
  }
  func.func @transform_2(%arg0: i32) -> (i32, i32, i32) {
    %c0_i32 = arith.constant 0 : i32
    %c0_i32_0 = arith.constant 0 : i32
    %c0_i32_1 = arith.constant 0 : i32
    %c0_i32_2 = arith.constant 0 : i32
    return %c0_i32, %c0_i32_0, %c0_i32_1 : i32, i32, i32
  }
  func.func @transform_3(%arg0: i32) -> (i32, i32, i32) {
    %c0_i32 = arith.constant 0 : i32
    %c0_i32_0 = arith.constant 0 : i32
    %c0_i32_1 = arith.constant 0 : i32
    %c0_i32_2 = arith.constant 0 : i32
    return %c0_i32, %c0_i32_0, %c0_i32_1 : i32, i32, i32
  }
  func.func @transform_4(%arg0: i32) -> (i32, i32) {
    %c0_i32 = arith.constant 0 : i32
    %c0_i32_0 = arith.constant 0 : i32
    %c0_i32_1 = arith.constant 0 : i32
    return %c0_i32, %c0_i32_0 : i32, i32
  }
  func.func @transform_5(%arg0: i32) -> (i32, i32) {
    %c0_i32 = arith.constant 0 : i32
    %c0_i32_0 = arith.constant 0 : i32
    return %arg0, %c0_i32 : i32, i32
  }
}

</mosaic_0001>

<llo_original>
// kernel: tpu_custom_call.1
$region0: #{tpu_custom_call.1}
  #allocation0 [shape = 'u32[]', space=smem, size = 0x4, offset = 0x4, fixed_abs, tag = 'smem constant byte address 0x4 - core index']
  #allocation1 [shape = 'u32[144,128]{1,0:T(1,128)}', space=vmem, size = 0x12000, scoped, tag = 'internal scratch']
  #allocation2 [shape = 'f32[128,256]{1,0:T(8,128)}', space=vmem, size = 0x20000, scoped, tag = 'scratch operand']
  %s0 = inlined_call_operand.hbm [shape: f32[256,256], index: 0, kind: input, shape index: {}]
  %s1 = inlined_call_operand.hbm [shape: bf16[1,256,512], index: 1, kind: input, shape index: {}]
  %s2 = inlined_call_operand.hbm [shape: f32[1,1,512], index: 2, kind: input, shape index: {}]
  %s3 = inlined_call_operand.hbm [shape: bf16[1,512,256], index: 3, kind: input, shape index: {}]
  %s4 = inlined_call_operand.vmem [shape: f32[1,256], index: 4, kind: input, shape index: {}]
  %s5 = inlined_call_operand.hbm [shape: f32[256,256], index: 5, kind: output, shape index: {}]
  %s6 = sld [smem:[#allocation0]]
  $region69: #{tpu_custom_call.1} parent=0
    _
  %s8 = ssub.s32 1, %s6
  %s9 = scalar_select 0, %s8, %s6
  $region1: #{tpu_custom_call.1} parent=0
    #allocation3 [shape = 'u8[262144]{0}', space=vmem, size = 0x40000, scoped, tag = 'input window, operand 0']
    #allocation4 [shape = 's32[2]{0}', space=sflag, size = 0x8, scoped, tag = 'scoped memory for tpu_custom_call.1']
    #allocation5 [shape = 's32[2]{0}', space=sflag, size = 0x8, scoped, tag = 'scoped memory for tpu_custom_call.1']
    #allocation6 [shape = 'u8[262144]{0}', space=vmem, size = 0x40000, scoped, tag = 'input window, operand 1, single buffered']
    #allocation7 [shape = 's32[1]{0}', space=sflag, size = 0x4, scoped, tag = 'scoped memory for tpu_custom_call.1']
    #allocation8 [shape = 'u8[2048]{0}', space=vmem, size = 0x800, scoped, tag = 'input window, operand 2, single buffered']
    #allocation9 [shape = 'u8[262144]{0}', space=vmem, size = 0x40000, scoped, tag = 'input window, operand 3, single buffered']
    #allocation10 [shape = 's32[1]{0}', space=sflag, size = 0x4, scoped, tag = 'scoped memory for tpu_custom_call.1']
    #allocation11 [shape = 'u8[262144]{0}', space=vmem, size = 0x40000, scoped, tag = 'output window, operand 0']
    %10 = vsyncpa [#allocation4], 0
    %s11 = scalar_lea.sflag [#allocation4], 1
    %12 = vsyncpa %s11, 0
    %13 = vsyncpa [#allocation7], 0
    %14 = vsyncpa [#allocation10], 0
    %15 = vsyncpa [#allocation5], 0
    %s16 = scalar_lea.sflag [#allocation5], 1
    %17 = vsyncpa %s16, 0
    loop: start=0, step=1, limit=4
    $region2: #{tpu_custom_call.1} parent=1 // loop_pre_header
      _
    $region3: #{tpu_custom_call.1} parent=1 // loop_header
      %s19 = sphi 0, %s23
      %p20 = scmp.ge.s32.totalorder %s19, 4
      %s29 = sphi 0, %s31
      %s32 = sphi 0, %s29
      %s33 = sphi 0, %s32
      %s49 = sphi 0, %s33
      %s53 = sphi 0, %s53
      %s55 = sphi 0, %s53
      %s56 = sphi 0, %s55
      %s70 = sphi 0, %s56
      %s74 = sphi 0, %s74
      %s76 = sphi 0, %s74
      %s77 = sphi 0, %s76
      %s91 = sphi 0, %s77
      %s95 = sphi 0, %s95
      %s97 = sphi 0, %s95
      %s98 = sphi 0, %s97
      %s112 = sphi 0, %s98
      %s116 = sphi 0, %s116
      %s118 = sphi 0, %s116
      %s119 = sphi 0, %s118
      %s133 = sphi 0, %s119
      %s139 = sphi 0, %s141
      %s142 = sphi 0, %s139
      %s143 = sphi 0, %s142
      %s159 = sphi 0, %s143
    $region4: #{tpu_custom_call.1} parent=1 // loop_header_branch
      %22 = sbr.rel (%p20) target = $region8
    $region5: #{tpu_custom_call.1} parent=1 // loop_body
      %s24 = ssub.s32 %s19, 1
      %s25 = ssub.s32 %s19, 2
      %s26 = sadd.s32 %s19, 1
      %s27 = ssub.s32 %s19, %s26
      %p28 = scmp.eq.s32.totalorder %s27, 0
      %s30 = sadd.s32 %s29, 1
      %s31 = scalar_select %p28, %s29, %s30
      %p34 = pneg %p28
      %p35 = scmp.eq.s32.totalorder %s19, 1
      %p36 = por %p34, %p35
      %p37 = scmp.ne.s32.totalorder %s29, %s32
      %p38 = scmp.eq.s32.totalorder %s19, 0
      %p39 = por %p37, %p38
      %p40 = scmp.ne.s32.totalorder %s29, %s32
      %p41 = scmp.eq.s32.totalorder %s24, 1
      %p42 = por %p40, %p41
      %p43 = scmp.ne.s32.totalorder %s32, %s33
      %p44 = scmp.eq.s32.totalorder %s24, 0
      %p45 = por %p43, %p44
      %p46 = scmp.ne.s32.totalorder %s32, %s33
      %p47 = scmp.eq.s32.totalorder %s25, 1
      %p48 = por %p46, %p47
      %p50 = scmp.ne.s32.totalorder %s33, %s49
      %p51 = scmp.eq.s32.totalorder %s25, 0
      %p52 = por %p50, %p51
      %s54 = sadd.s32 %s53, 1
      %p57 = scmp.eq.s32.totalorder %s19, 1
      %p58 = scmp.ne.s32.totalorder %s53, %s55
      %p59 = scmp.eq.s32.totalorder %s19, 0
      %p60 = por %p58, %p59
      %p61 = scmp.ne.s32.totalorder %s53, %s55
      %p62 = scmp.eq.s32.totalorder %s24, 1
      %p63 = por %p61, %p62
      %p64 = scmp.ne.s32.totalorder %s55, %s56
      %p65 = scmp.eq.s32.totalorder %s24, 0
      %p66 = por %p64, %p65
      %p67 = scmp.ne.s32.totalorder %s55, %s56
      %p68 = scmp.eq.s32.totalorder %s25, 1
      %p69 = por %p67, %p68
      %p71 = scmp.ne.s32.totalorder %s56, %s70
      %p72 = scmp.eq.s32.totalorder %s25, 0
      %p73 = por %p71, %p72
      %s75 = sadd.s32 %s74, 1
      %p78 = scmp.eq.s32.totalorder %s19, 1
      %p79 = scmp.ne.s32.totalorder %s74, %s76
      %p80 = scmp.eq.s32.totalorder %s19, 0
      %p81 = por %p79, %p80
      %p82 = scmp.ne.s32.totalorder %s74, %s76
      %p83 = scmp.eq.s32.totalorder %s24, 1
      %p84 = por %p82, %p83
      %p85 = scmp.ne.s32.totalorder %s76, %s77
      %p86 = scmp.eq.s32.totalorder %s24, 0
      %p87 = por %p85, %p86
      %p88 = scmp.ne.s32.totalorder %s76, %s77
      %p89 = scmp.eq.s32.totalorder %s25, 1
      %p90 = por %p88, %p89
      %p92 = scmp.ne.s32.totalorder %s77, %s91
      %p93 = scmp.eq.s32.totalorder %s25, 0
      %p94 = por %p92, %p93
      %s96 = sadd.s32 %s95, 1
      %p99 = scmp.eq.s32.totalorder %s19, 1
      %p100 = scmp.ne.s32.totalorder %s95, %s97
      %p101 = scmp.eq.s32.totalorder %s19, 0
      %p102 = por %p100, %p101
      %p103 = scmp.ne.s32.totalorder %s95, %s97
      %p104 = scmp.eq.s32.totalorder %s24, 1
      %p105 = por %p103, %p104
      %p106 = scmp.ne.s32.totalorder %s97, %s98
      %p107 = scmp.eq.s32.totalorder %s24, 0
      %p108 = por %p106, %p107
      %p109 = scmp.ne.s32.totalorder %s97, %s98
      %p110 = scmp.eq.s32.totalorder %s25, 1
      %p111 = por %p109, %p110
      %p113 = scmp.ne.s32.totalorder %s98, %s112
      %p114 = scmp.eq.s32.totalorder %s25, 0
      %p115 = por %p113, %p114
      %s117 = sadd.s32 %s116, 1
      %p120 = scmp.eq.s32.totalorder %s19, 1
      %p121 = scmp.ne.s32.totalorder %s116, %s118
      %p122 = scmp.eq.s32.totalorder %s19, 0
      %p123 = por %p121, %p122
      %p124 = scmp.ne.s32.totalorder %s116, %s118
      %p125 = scmp.eq.s32.totalorder %s24, 1
      %p126 = por %p124, %p125
      %p127 = scmp.ne.s32.totalorder %s118, %s119
      %p128 = scmp.eq.s32.totalorder %s24, 0
      %p129 = por %p127, %p128
      %p130 = scmp.ne.s32.totalorder %s118, %s119
      %p131 = scmp.eq.s32.totalorder %s25, 1
      %p132 = por %p130, %p131
      %p134 = scmp.ne.s32.totalorder %s119, %s133
      %p135 = scmp.eq.s32.totalorder %s25, 0
      %p136 = por %p134, %p135
      %s137 = ssub.s32 %s19, %s26
      %p138 = scmp.eq.s32.totalorder %s137, 0
      %s140 = sadd.s32 %s139, 1
      %s141 = scalar_select %p138, %s139, %s140
      %p144 = pneg %p138
      %p145 = scmp.eq.s32.totalorder %s19, 1
      %p146 = por %p144, %p145
      %p147 = scmp.ne.s32.totalorder %s139, %s142
      %p148 = scmp.eq.s32.totalorder %s19, 0
      %p149 = por %p147, %p148
      %p150 = scmp.ne.s32.totalorder %s139, %s142
      %p151 = scmp.eq.s32.totalorder %s24, 1
      %p152 = por %p150, %p151
      %p153 = scmp.ne.s32.totalorder %s142, %s143
      %p154 = scmp.eq.s32.totalorder %s24, 0
      %p155 = por %p153, %p154
      %p156 = scmp.ne.s32.totalorder %s142, %s143
      %p157 = scmp.eq.s32.totalorder %s25, 1
      %p158 = por %p156, %p157
      %p160 = scmp.ne.s32.totalorder %s143, %s159
      %p161 = scmp.eq.s32.totalorder %s25, 0
      %p162 = por %p160, %p161
      %p163 = scmp.le.s32.totalorder 1, %s19
      %p164 = scmp.lt.s32.totalorder %s19, 3
      %p165 = pnand %p163, %p164
      %p166 = pneg %p165
      // Predicated region
      $region9: #{tpu_custom_call.1} parent=5 // pred_check
        _
      $region10: #{tpu_custom_call.1} parent=5 // pred_check_branch
        %168 = sbr.rel (%p165) target = $region12
      $region11: #{tpu_custom_call.1} parent=5 // pred_region
        %s169 = ssub.s32 %s19, 1
        // Predicated region
        $region13: #{tpu_custom_call.1} parent=11 // pred_check
          %p170 = pneg %p66
        $region14: #{tpu_custom_call.1} parent=11 // pred_check_branch
          %172 = sbr.rel (%p170) target = $region16
        $region15: #{tpu_custom_call.1} parent=11 // pred_region
          %s174 = ssub.s32 8192, 8192
          %175 = vsyncadd [#allocation7], %s174
          %s176 = sshll.u32 [#allocation6], 4
          %s177 = int_to_ptr.vmem [resolvable:$true] %s176
          %182 = dma.hbm_to_vmem [thread:$0]  %s1, 8192, %s177, [#allocation7], 256, 256, 16
        $region16: #{tpu_custom_call.1} parent=11 // pred_fallthru
          _
        // Predicated region
        $region17: #{tpu_custom_call.1} parent=11 // pred_check
          %p183 = pneg %p87
        $region18: #{tpu_custom_call.1} parent=11 // pred_check_branch
          %185 = sbr.rel (%p183) target = $region20
        $region19: #{tpu_custom_call.1} parent=11 // pred_region
          %s187 = ssub.s32 64, 64
          %188 = vsyncadd [#allocation7], %s187
          %s190 = sshll.u32 [#allocation8], 4
          %s191 = int_to_ptr.vmem [resolvable:$true] %s190
          %193 = dma.hbm_to_vmem [thread:$0]  %s2, 64, %s191, [#allocation7]
        $region20: #{tpu_custom_call.1} parent=11 // pred_fallthru
          _
        // Predicated region
        $region21: #{tpu_custom_call.1} parent=11 // pred_check
          %p194 = pneg %p108
        $region22: #{tpu_custom_call.1} parent=11 // pred_check_branch
          %196 = sbr.rel (%p194) target = $region24
        $region23: #{tpu_custom_call.1} parent=11 // pred_region
          %s198 = ssub.s32 8192, 8192
          %199 = vsyncadd [#allocation10], %s198
          %s200 = sshll.u32 [#allocation9], 4
          %s201 = int_to_ptr.vmem [resolvable:$true] %s200
          %206 = dma.hbm_to_vmem [thread:$0]  %s3, 8192, %s201, [#allocation10], 128, 128, 8
        $region24: #{tpu_custom_call.1} parent=11 // pred_fallthru
          _
        // Predicated region
        $region25: #{tpu_custom_call.1} parent=11 // pred_check
          %p207 = pneg %p129
        $region26: #{tpu_custom_call.1} parent=11 // pred_check_branch
          %209 = sbr.rel (%p207) target = $region28
        $region27: #{tpu_custom_call.1} parent=11 // pred_region
          _
        $region28: #{tpu_custom_call.1} parent=11 // pred_fallthru
          _
      $region12: #{tpu_custom_call.1} parent=5 // pred_fallthru
        _
      %p210 = scmp.lt.s32.totalorder %s19, 2
      // Predicated region
      $region29: #{tpu_custom_call.1} parent=5 // pred_check
        %p211 = pneg %p210
      $region30: #{tpu_custom_call.1} parent=5 // pred_check_branch
        %213 = sbr.rel (%p211) target = $region32
      $region31: #{tpu_custom_call.1} parent=5 // pred_region
        // Predicated region
        $region33: #{tpu_custom_call.1} parent=31 // pred_check
          %p214 = pneg %p39
        $region34: #{tpu_custom_call.1} parent=31 // pred_check_branch
          %216 = sbr.rel (%p214) target = $region36
        $region35: #{tpu_custom_call.1} parent=31 // pred_region
          %s217 = sand.u32 %s29, 1
          %s218 = scalar_lea.sflag [#allocation4], %s217
          %s219 = sand.u32 %s29, 1
          %s220 = smul.addr %s219, 256
          %s221 = scalar_lea.vmem [#allocation3], %s220
          %s222 = smul.u32 16, %s19
          %s224 = ssub.s32 4096, 4096
          %225 = vsyncadd %s218, %s224
          %s226 = smul.addr %s222, 2
          %s227 = smul.addr %s226, 128
          %s228 = scalar_lea.hbm %s0, %s227
          %s229 = sshll.u32 %s221, 4
          %s230 = int_to_ptr.vmem [resolvable:$true] %s229
          %235 = dma.hbm_to_vmem [thread:$0]  %s228, 4096, %s230, %s218, 256, 256, 16
        $region36: #{tpu_custom_call.1} parent=31 // pred_fallthru
          _
      $region32: #{tpu_custom_call.1} parent=5 // pred_fallthru
        _
      %p236 = scmp.le.s32.totalorder 1, %s19
      %p237 = scmp.lt.s32.totalorder %s19, 3
      %p238 = pnand %p236, %p237
      %p239 = pneg %p238
      // Predicated region
      $region37: #{tpu_custom_call.1} parent=5 // pred_check
        _
      $region38: #{tpu_custom_call.1} parent=5 // pred_check_branch
        %241 = sbr.rel (%p238) target = $region40
      $region39: #{tpu_custom_call.1} parent=5 // pred_region
        %s242 = ssub.s32 %s19, 1
        %s243 = sand.u32 %s32, 1
        %s244 = scalar_lea.sflag [#allocation4], %s243
        %s245 = sand.u32 %s32, 1
        %s246 = smul.addr %s245, 256
        %s247 = scalar_lea.vmem [#allocation3], %s246
        // Predicated region
        $region41: #{tpu_custom_call.1} parent=39 // pred_check
          %p248 = pneg %p45
        $region42: #{tpu_custom_call.1} parent=39 // pred_check_branch
          %250 = sbr.rel (%p248) target = $region44
        $region43: #{tpu_custom_call.1} parent=39 // pred_region
          %251 = dma.done %s244, 4096
        $region44: #{tpu_custom_call.1} parent=39 // pred_fallthru
          _
        // Predicated region
        $region45: #{tpu_custom_call.1} parent=39 // pred_check
          %p252 = pneg %p66
        $region46: #{tpu_custom_call.1} parent=39 // pred_check_branch
          %254 = sbr.rel (%p252) target = $region48
        $region47: #{tpu_custom_call.1} parent=39 // pred_region
          %255 = dma.done [#allocation7], 8192
        $region48: #{tpu_custom_call.1} parent=39 // pred_fallthru
          _
        // Predicated region
        $region49: #{tpu_custom_call.1} parent=39 // pred_check
          %p256 = pneg %p87
        $region50: #{tpu_custom_call.1} parent=39 // pred_check_branch
          %258 = sbr.rel (%p256) target = $region52
        $region51: #{tpu_custom_call.1} parent=39 // pred_region
          %259 = dma.done [#allocation7], 64
        $region52: #{tpu_custom_call.1} parent=39 // pred_fallthru
          _
        // Predicated region
        $region53: #{tpu_custom_call.1} parent=39 // pred_check
          %p260 = pneg %p108
        $region54: #{tpu_custom_call.1} parent=39 // pred_check_branch
          %262 = sbr.rel (%p260) target = $region56
        $region55: #{tpu_custom_call.1} parent=39 // pred_region
          %263 = dma.done [#allocation10], 8192
        $region56: #{tpu_custom_call.1} parent=39 // pred_fallthru
          _
        %s264 = sand.u32 %s32, 1
        %s265 = scalar_lea.sflag [#allocation4], %s264
        %s266 = sand.u32 %s32, 1
        %s267 = smul.addr %s266, 256
        %s268 = scalar_lea.vmem [#allocation3], %s267
        %p269 = pneg %p45
        %p270 = pneg %p42
        %p271 = pneg %p66
        %p272 = pneg %p63
        %p273 = pneg %p87
        %p274 = pneg %p84
        %p275 = pneg %p108
        %p276 = pneg %p105
        %p277 = pneg %p129
        %p278 = pneg %p126
        %p279 = pneg %p155
        %p280 = pneg %p152
        %s281 = sand.u32 %s142, 1
        %s282 = scalar_lea.sflag [#allocation5], %s281
        %s283 = sand.u32 %s142, 1
        %s284 = smul.addr %s283, 256
        %s285 = scalar_lea.vmem [#allocation11], %s284
        %s286 = smul.u32 16, %s24
        %s287 = smul.u32 16, %s24
        %288 = vst [vmem:[#allocation2] sm:$0xff] 0.0
        %289 = vst [vmem:[#allocation2 + $0x8] sm:$0xff] 0.0
        %290 = vst [vmem:[#allocation2 + $0x10] sm:$0xff] 0.0
        %291 = vst [vmem:[#allocation2 + $0x18] sm:$0xff] 0.0
        %292 = vst [vmem:[#allocation2 + $0x20] sm:$0xff] 0.0
        %293 = vst [vmem:[#allocation2 + $0x28] sm:$0xff] 0.0
        %294 = vst [vmem:[#allocation2 + $0x30] sm:$0xff] 0.0
        %295 = vst [vmem:[#allocation2 + $0x38] sm:$0xff] 0.0
        %296 = vst [vmem:[#allocation2 + $0x40] sm:$0xff] 0.0
        %297 = vst [vmem:[#allocation2 + $0x48] sm:$0xff] 0.0
        %298 = vst [vmem:[#allocation2 + $0x50] sm:$0xff] 0.0
        %299 = vst [vmem:[#allocation2 + $0x58] sm:$0xff] 0.0
        %300 = vst [vmem:[#allocation2 + $0x60] sm:$0xff] 0.0
        %301 = vst [vmem:[#allocation2 + $0x68] sm:$0xff] 0.0
        %302 = vst [vmem:[#allocation2 + $0x70] sm:$0xff] 0.0
        %303 = vst [vmem:[#allocation2 + $0x78] sm:$0xff] 0.0
        %304 = vst [vmem:[#allocation2 + $0x80] sm:$0xff] 0.0
        %305 = vst [vmem:[#allocation2 + $0x88] sm:$0xff] 0.0
        %306 = vst [vmem:[#allocation2 + $0x90] sm:$0xff] 0.0
        %307 = vst [vmem:[#allocation2 + $0x98] sm:$0xff] 0.0
        %308 = vst [vmem:[#allocation2 + $0xa0] sm:$0xff] 0.0
        %309 = vst [vmem:[#allocation2 + $0xa8] sm:$0xff] 0.0
        %310 = vst [vmem:[#allocation2 + $0xb0] sm:$0xff] 0.0
        %311 = vst [vmem:[#allocation2 + $0xb8] sm:$0xff] 0.0
        %312 = vst [vmem:[#allocation2 + $0xc0] sm:$0xff] 0.0
        %313 = vst [vmem:[#allocation2 + $0xc8] sm:$0xff] 0.0
        %314 = vst [vmem:[#allocation2 + $0xd0] sm:$0xff] 0.0
        %315 = vst [vmem:[#allocation2 + $0xd8] sm:$0xff] 0.0
        %316 = vst [vmem:[#allocation2 + $0xe0] sm:$0xff] 0.0
        %317 = vst [vmem:[#allocation2 + $0xe8] sm:$0xff] 0.0
        %318 = vst [vmem:[#allocation2 + $0xf0] sm:$0xff] 0.0
        %319 = vst [vmem:[#allocation2 + $0xf8] sm:$0xff] 0.0
        %v320 = vld [vmem:[%s247] sm:$0xff]
        %v321 = vld [vmem:[%s247 + $0x8] sm:$0xff]
        %v322 = vld [vmem:[%s247 + $0x10] sm:$0xff]
        %v323 = vld [vmem:[%s247 + $0x18] sm:$0xff]
        %v324 = vld [vmem:[%s247 + $0x20] sm:$0xff]
        %v325 = vld [vmem:[%s247 + $0x28] sm:$0xff]
        %v326 = vld [vmem:[%s247 + $0x30] sm:$0xff]
        %v327 = vld [vmem:[%s247 + $0x38] sm:$0xff]
        %v328 = vld [vmem:[%s247 + $0x40] sm:$0xff]
        %v329 = vld [vmem:[%s247 + $0x48] sm:$0xff]
        %v330 = vld [vmem:[%s247 + $0x50] sm:$0xff]
        %v331 = vld [vmem:[%s247 + $0x58] sm:$0xff]
        %v332 = vld [vmem:[%s247 + $0x60] sm:$0xff]
        %v333 = vld [vmem:[%s247 + $0x68] sm:$0xff]
        %v334 = vld [vmem:[%s247 + $0x70] sm:$0xff]
        %v335 = vld [vmem:[%s247 + $0x78] sm:$0xff]
        %v336 = vld [vmem:[%s247 + $0x80] sm:$0xff]
        %v337 = vld [vmem:[%s247 + $0x88] sm:$0xff]
        %v338 = vld [vmem:[%s247 + $0x90] sm:$0xff]
        %v339 = vld [vmem:[%s247 + $0x98] sm:$0xff]
        %v340 = vld [vmem:[%s247 + $0xa0] sm:$0xff]
        %v341 = vld [vmem:[%s247 + $0xa8] sm:$0xff]
        %v342 = vld [vmem:[%s247 + $0xb0] sm:$0xff]
        %v343 = vld [vmem:[%s247 + $0xb8] sm:$0xff]
        %v344 = vld [vmem:[%s247 + $0xc0] sm:$0xff]
        %v345 = vld [vmem:[%s247 + $0xc8] sm:$0xff]
        %v346 = vld [vmem:[%s247 + $0xd0] sm:$0xff]
        %v347 = vld [vmem:[%s247 + $0xd8] sm:$0xff]
        %v348 = vld [vmem:[%s247 + $0xe0] sm:$0xff]
        %v349 = vld [vmem:[%s247 + $0xe8] sm:$0xff]
        %v350 = vld [vmem:[%s247 + $0xf0] sm:$0xff]
        %v351 = vld [vmem:[%s247 + $0xf8] sm:$0xff]
        %v352 = vpack.c.bf16 %v322, %v320
        %v353 = vpack.c.bf16 %v323, %v321
        %v354 = vpack.c.bf16 %v326, %v324
        %v355 = vpack.c.bf16 %v327, %v325
        %v356 = vpack.c.bf16 %v330, %v328
        %v357 = vpack.c.bf16 %v331, %v329
        %v358 = vpack.c.bf16 %v334, %v332
        %v359 = vpack.c.bf16 %v335, %v333
        %v360 = vpack.c.bf16 %v338, %v336
        %v361 = vpack.c.bf16 %v339, %v337
        %v362 = vpack.c.bf16 %v342, %v340
        %v363 = vpack.c.bf16 %v343, %v341
        %v364 = vpack.c.bf16 %v346, %v344
        %v365 = vpack.c.bf16 %v347, %v345
        %v366 = vpack.c.bf16 %v350, %v348
        %v367 = vpack.c.bf16 %v351, %v349
        %v368 = vld [vmem:[#allocation6] sm:$0xff]
        %v369 = vld [vmem:[#allocation6 + $0x8] sm:$0xff]
        %v370 = vld [vmem:[#allocation6 + $0x10] sm:$0xff]
        %v371 = vld [vmem:[#allocation6 + $0x18] sm:$0xff]
        %v372 = vld [vmem:[#allocation6 + $0x20] sm:$0xff]
        %v373 = vld [vmem:[#allocation6 + $0x28] sm:$0xff]
        %v374 = vld [vmem:[#allocation6 + $0x30] sm:$0xff]
        %v375 = vld [vmem:[#allocation6 + $0x38] sm:$0xff]
        %v376 = vld [vmem:[#allocation6 + $0x40] sm:$0xff]
        %v377 = vld [vmem:[#allocation6 + $0x48] sm:$0xff]
        %v378 = vld [vmem:[#allocation6 + $0x50] sm:$0xff]
        %v379 = vld [vmem:[#allocation6 + $0x58] sm:$0xff]
        %v380 = vld [vmem:[#allocation6 + $0x60] sm:$0xff]
        %v381 = vld [vmem:[#allocation6 + $0x68] sm:$0xff]
        %v382 = vld [vmem:[#allocation6 + $0x70] sm:$0xff]
        %v383 = vld [vmem:[#allocation6 + $0x78] sm:$0xff]
        %v384 = vld [vmem:[#allocation6 + $0x80] sm:$0xff]
        %v385 = vld [vmem:[#allocation6 + $0x88] sm:$0xff]
        %v386 = vld [vmem:[#allocation6 + $0x90] sm:$0xff]
        %v387 = vld [vmem:[#allocation6 + $0x98] sm:$0xff]
        %v388 = vld [vmem:[#allocation6 + $0xa0] sm:$0xff]
        %v389 = vld [vmem:[#allocation6 + $0xa8] sm:$0xff]
        %v390 = vld [vmem:[#allocation6 + $0xb0] sm:$0xff]
        %v391 = vld [vmem:[#allocation6 + $0xb8] sm:$0xff]
        %v392 = vld [vmem:[#allocation6 + $0xc0] sm:$0xff]
        %v393 = vld [vmem:[#allocation6 + $0xc8] sm:$0xff]
        %v394 = vld [vmem:[#allocation6 + $0xd0] sm:$0xff]
        %v395 = vld [vmem:[#allocation6 + $0xd8] sm:$0xff]
        %v396 = vld [vmem:[#allocation6 + $0xe0] sm:$0xff]
        %v397 = vld [vmem:[#allocation6 + $0xe8] sm:$0xff]
        %v398 = vld [vmem:[#allocation6 + $0xf0] sm:$0xff]
        %v399 = vld [vmem:[#allocation6 + $0xf8] sm:$0xff]
        %v400 = vld [vmem:[#allocation6 + $0x100] sm:$0xff]
        %v401 = vld [vmem:[#allocation6 + $0x108] sm:$0xff]
        %v402 = vld [vmem:[#allocation6 + $0x110] sm:$0xff]
        %v403 = vld [vmem:[#allocation6 + $0x118] sm:$0xff]
        %v404 = vld [vmem:[#allocation6 + $0x120] sm:$0xff]
        %v405 = vld [vmem:[#allocation6 + $0x128] sm:$0xff]
        %v406 = vld [vmem:[#allocation6 + $0x130] sm:$0xff]
        %v407 = vld [vmem:[#allocation6 + $0x138] sm:$0xff]
        %v408 = vld [vmem:[#allocation6 + $0x140] sm:$0xff]
        %v409 = vld [vmem:[#allocation6 + $0x148] sm:$0xff]
        %v410 = vld [vmem:[#allocation6 + $0x150] sm:$0xff]
        %v411 = vld [vmem:[#allocation6 + $0x158] sm:$0xff]
        %v412 = vld [vmem:[#allocation6 + $0x160] sm:$0xff]
        %v413 = vld [vmem:[#allocation6 + $0x168] sm:$0xff]
        %v414 = vld [vmem:[#allocation6 + $0x170] sm:$0xff]
        %v415 = vld [vmem:[#allocation6 + $0x178] sm:$0xff]
        %v416 = vld [vmem:[#allocation6 + $0x180] sm:$0xff]
        %v417 = vld [vmem:[#allocation6 + $0x188] sm:$0xff]
        %v418 = vld [vmem:[#allocation6 + $0x190] sm:$0xff]
        %v419 = vld [vmem:[#allocation6 + $0x198] sm:$0xff]
        %v420 = vld [vmem:[#allocation6 + $0x1a0] sm:$0xff]
        %v421 = vld [vmem:[#allocation6 + $0x1a8] sm:$0xff]
        %v422 = vld [vmem:[#allocation6 + $0x1b0] sm:$0xff]
        %v423 = vld [vmem:[#allocation6 + $0x1b8] sm:$0xff]
        %v424 = vld [vmem:[#allocation6 + $0x1c0] sm:$0xff]
        %v425 = vld [vmem:[#allocation6 + $0x1c8] sm:$0xff]
        %v426 = vld [vmem:[#allocation6 + $0x1d0] sm:$0xff]
        %v427 = vld [vmem:[#allocation6 + $0x1d8] sm:$0xff]
        %v428 = vld [vmem:[#allocation6 + $0x1e0] sm:$0xff]
        %v429 = vld [vmem:[#allocation6 + $0x1e8] sm:$0xff]
        %v430 = vld [vmem:[#allocation6 + $0x1f0] sm:$0xff]
        %v431 = vld [vmem:[#allocation6 + $0x1f8] sm:$0xff]
        %v432 = vld [vmem:[#allocation8] sm:$0xf]
        %v434 = vlaneseq
        %v435 = vshrl.u32 %v434, 7
        %v436 = vsub.s32 0, %v435
        %v437 = vrot.slane %v432, %v436
        %v438 = vlaneseq
        %v439 = vshrl.u32 %v438, 7
        %v440 = vsub.s32 1, %v439
        %v441 = vrot.slane %v432, %v440
        %v442 = vlaneseq
        %v443 = vshrl.u32 %v442, 7
        %v444 = vsub.s32 2, %v443
        %v445 = vrot.slane %v432, %v444
        %v446 = vlaneseq
        %v447 = vshrl.u32 %v446, 7
        %v448 = vsub.s32 3, %v447
        %v449 = vrot.slane %v432, %v448
        %v518 = vunpack.c.l.b16 %v368
        %v519 = vunpack.c.h.b16 %v368
        %v520 = vunpack.c.l.b16 %v369
        %v521 = vunpack.c.h.b16 %v369
        %v522 = vunpack.c.l.b16 %v370
        %v523 = vunpack.c.h.b16 %v370
        %v524 = vunpack.c.l.b16 %v371
        %v525 = vunpack.c.h.b16 %v371
        %v526 = vunpack.c.l.b16 %v372
        %v527 = vunpack.c.h.b16 %v372
        %v528 = vunpack.c.l.b16 %v373
        %v529 = vunpack.c.h.b16 %v373
        %v530 = vunpack.c.l.b16 %v374
        %v531 = vunpack.c.h.b16 %v374
        %v532 = vunpack.c.l.b16 %v375
        %v533 = vunpack.c.h.b16 %v375
        %v534 = vunpack.c.l.b16 %v376
        %v535 = vunpack.c.h.b16 %v376
        %v536 = vunpack.c.l.b16 %v377
        %v537 = vunpack.c.h.b16 %v377
        %v538 = vunpack.c.l.b16 %v378
        %v539 = vunpack.c.h.b16 %v378
        %v540 = vunpack.c.l.b16 %v379
        %v541 = vunpack.c.h.b16 %v379
        %v542 = vunpack.c.l.b16 %v380
        %v543 = vunpack.c.h.b16 %v380
        %v544 = vunpack.c.l.b16 %v381
        %v545 = vunpack.c.h.b16 %v381
        %v546 = vunpack.c.l.b16 %v382
        %v547 = vunpack.c.h.b16 %v382
        %v548 = vunpack.c.l.b16 %v383
        %v549 = vunpack.c.h.b16 %v383
        %v550 = vunpack.c.l.b16 %v384
        %v551 = vunpack.c.h.b16 %v384
        %v552 = vunpack.c.l.b16 %v385
        %v553 = vunpack.c.h.b16 %v385
        %v554 = vunpack.c.l.b16 %v386
        %v555 = vunpack.c.h.b16 %v386
        %v556 = vunpack.c.l.b16 %v387
        %v557 = vunpack.c.h.b16 %v387
        %v558 = vunpack.c.l.b16 %v388
        %v559 = vunpack.c.h.b16 %v388
        %v560 = vunpack.c.l.b16 %v389
        %v561 = vunpack.c.h.b16 %v389
        %v562 = vunpack.c.l.b16 %v390
        %v563 = vunpack.c.h.b16 %v390
        %v564 = vunpack.c.l.b16 %v391
        %v565 = vunpack.c.h.b16 %v391
        %v566 = vunpack.c.l.b16 %v392
        %v567 = vunpack.c.h.b16 %v392
        %v568 = vunpack.c.l.b16 %v393
        %v569 = vunpack.c.h.b16 %v393
        %v570 = vunpack.c.l.b16 %v394
        %v571 = vunpack.c.h.b16 %v394
        %v572 = vunpack.c.l.b16 %v395
        %v573 = vunpack.c.h.b16 %v395
        %v574 = vunpack.c.l.b16 %v396
        %v575 = vunpack.c.h.b16 %v396
        %v576 = vunpack.c.l.b16 %v397
        %v577 = vunpack.c.h.b16 %v397
        %v578 = vunpack.c.l.b16 %v398
        %v579 = vunpack.c.h.b16 %v398
        %v580 = vunpack.c.l.b16 %v399
        %v581 = vunpack.c.h.b16 %v399
        %v582 = vunpack.c.l.b16 %v400
        %v583 = vunpack.c.h.b16 %v400
        %v584 = vunpack.c.l.b16 %v401
        %v585 = vunpack.c.h.b16 %v401
        %v586 = vunpack.c.l.b16 %v402
        %v587 = vunpack.c.h.b16 %v402
        %v588 = vunpack.c.l.b16 %v403
        %v589 = vunpack.c.h.b16 %v403
        %v590 = vunpack.c.l.b16 %v404
        %v591 = vunpack.c.h.b16 %v404
        %v592 = vunpack.c.l.b16 %v405
        %v593 = vunpack.c.h.b16 %v405
        %v594 = vunpack.c.l.b16 %v406
        %v595 = vunpack.c.h.b16 %v406
        %v596 = vunpack.c.l.b16 %v407
        %v597 = vunpack.c.h.b16 %v407
        %v598 = vunpack.c.l.b16 %v408
        %v599 = vunpack.c.h.b16 %v408
        %v600 = vunpack.c.l.b16 %v409
        %v601 = vunpack.c.h.b16 %v409
        %v602 = vunpack.c.l.b16 %v410
        %v603 = vunpack.c.h.b16 %v410
        %v604 = vunpack.c.l.b16 %v411
        %v605 = vunpack.c.h.b16 %v411
        %v606 = vunpack.c.l.b16 %v412
        %v607 = vunpack.c.h.b16 %v412
        %v608 = vunpack.c.l.b16 %v413
        %v609 = vunpack.c.h.b16 %v413
        %v610 = vunpack.c.l.b16 %v414
        %v611 = vunpack.c.h.b16 %v414
        %v612 = vunpack.c.l.b16 %v415
        %v613 = vunpack.c.h.b16 %v415
        %v614 = vunpack.c.l.b16 %v416
        %v615 = vunpack.c.h.b16 %v416
        %v616 = vunpack.c.l.b16 %v417
        %v617 = vunpack.c.h.b16 %v417
        %v618 = vunpack.c.l.b16 %v418
        %v619 = vunpack.c.h.b16 %v418
        %v620 = vunpack.c.l.b16 %v419
        %v621 = vunpack.c.h.b16 %v419
        %v622 = vunpack.c.l.b16 %v420
        %v623 = vunpack.c.h.b16 %v420
        %v624 = vunpack.c.l.b16 %v421
        %v625 = vunpack.c.h.b16 %v421
        %v626 = vunpack.c.l.b16 %v422
        %v627 = vunpack.c.h.b16 %v422
        %v628 = vunpack.c.l.b16 %v423
        %v629 = vunpack.c.h.b16 %v423
        %v630 = vunpack.c.l.b16 %v424
        %v631 = vunpack.c.h.b16 %v424
        %v632 = vunpack.c.l.b16 %v425
        %v633 = vunpack.c.h.b16 %v425
        %v634 = vunpack.c.l.b16 %v426
        %v635 = vunpack.c.h.b16 %v426
        %v636 = vunpack.c.l.b16 %v427
        %v637 = vunpack.c.h.b16 %v427
        %v638 = vunpack.c.l.b16 %v428
        %v639 = vunpack.c.h.b16 %v428
        %v640 = vunpack.c.l.b16 %v429
        %v641 = vunpack.c.h.b16 %v429
        %v642 = vunpack.c.l.b16 %v430
        %v643 = vunpack.c.h.b16 %v430
        %v644 = vunpack.c.l.b16 %v431
        %v645 = vunpack.c.h.b16 %v431
        %v646 = vpack.c.b16 %v522, %v518
        %v647 = vpack.c.b16 %v523, %v519
        %v648 = vpack.c.b16 %v524, %v520
        %v649 = vpack.c.b16 %v525, %v521
        %v650 = vpack.c.b16 %v530, %v526
        %v651 = vpack.c.b16 %v531, %v527
        %v652 = vpack.c.b16 %v532, %v528
        %v653 = vpack.c.b16 %v533, %v529
        %v654 = vpack.c.b16 %v538, %v534
        %v655 = vpack.c.b16 %v539, %v535
        %v656 = vpack.c.b16 %v540, %v536
        %v657 = vpack.c.b16 %v541, %v537
        %v658 = vpack.c.b16 %v546, %v542
        %v659 = vpack.c.b16 %v547, %v543
        %v660 = vpack.c.b16 %v548, %v544
        %v661 = vpack.c.b16 %v549, %v545
        %v662 = vpack.c.b16 %v554, %v550
        %v663 = vpack.c.b16 %v555, %v551
        %v664 = vpack.c.b16 %v556, %v552
        %v665 = vpack.c.b16 %v557, %v553
        %v666 = vpack.c.b16 %v562, %v558
        %v667 = vpack.c.b16 %v563, %v559
        %v668 = vpack.c.b16 %v564, %v560
        %v669 = vpack.c.b16 %v565, %v561
        %v670 = vpack.c.b16 %v570, %v566
        %v671 = vpack.c.b16 %v571, %v567
        %v672 = vpack.c.b16 %v572, %v568
        %v673 = vpack.c.b16 %v573, %v569
        %v674 = vpack.c.b16 %v578, %v574
        %v675 = vpack.c.b16 %v579, %v575
        %v676 = vpack.c.b16 %v580, %v576
        %v677 = vpack.c.b16 %v581, %v577
        %v678 = vpack.c.b16 %v586, %v582
        %v679 = vpack.c.b16 %v587, %v583
        %v680 = vpack.c.b16 %v588, %v584
        %v681 = vpack.c.b16 %v589, %v585
        %v682 = vpack.c.b16 %v594, %v590
        %v683 = vpack.c.b16 %v595, %v591
        %v684 = vpack.c.b16 %v596, %v592
        %v685 = vpack.c.b16 %v597, %v593
        %v686 = vpack.c.b16 %v602, %v598
        %v687 = vpack.c.b16 %v603, %v599
        %v688 = vpack.c.b16 %v604, %v600
        %v689 = vpack.c.b16 %v605, %v601
        %v690 = vpack.c.b16 %v610, %v606
        %v691 = vpack.c.b16 %v611, %v607
        %v692 = vpack.c.b16 %v612, %v608
        %v693 = vpack.c.b16 %v613, %v609
        %v694 = vpack.c.b16 %v618, %v614
        %v695 = vpack.c.b16 %v619, %v615
        %v696 = vpack.c.b16 %v620, %v616
        %v697 = vpack.c.b16 %v621, %v617
        %v698 = vpack.c.b16 %v626, %v622
        %v699 = vpack.c.b16 %v627, %v623
        %v700 = vpack.c.b16 %v628, %v624
        %v701 = vpack.c.b16 %v629, %v625
        %v702 = vpack.c.b16 %v634, %v630
        %v703 = vpack.c.b16 %v635, %v631
        %v704 = vpack.c.b16 %v636, %v632
        %v705 = vpack.c.b16 %v637, %v633
        %v706 = vpack.c.b16 %v642, %v638
        %v707 = vpack.c.b16 %v643, %v639
        %v708 = vpack.c.b16 %v644, %v640
        %v709 = vpack.c.b16 %v645, %v641
        %774 = vmatprep.subr.bf16.mxu0 %v675
        %775 = vmatpush1.bf16.msra.mxu0 %v674
        %776 = vmatprep.subr.bf16.mxu0 %v671
        %777 = vmatpush1.bf16.msra.mxu0 %v670
        %778 = vmatprep.subr.bf16.mxu0 %v667
        %779 = vmatpush1.bf16.msra.mxu0 %v666
        %780 = vmatprep.subr.bf16.mxu0 %v663
        %781 = vmatpush1.bf16.msra.mxu0 %v662
        %782 = vmatprep.subr.bf16.mxu0 %v659
        %783 = vmatpush1.bf16.msra.mxu0 %v658
        %784 = vmatprep.subr.bf16.mxu0 %v655
        %785 = vmatpush1.bf16.msra.mxu0 %v654
        %786 = vmatprep.subr.bf16.mxu0 %v651
        %787 = vmatpush1.bf16.msra.mxu0 %v650
        %788 = vmatprep.subr.bf16.mxu0 %v647
        %789 = vmatpush1.bf16.msra.mxu0 %v646
        %790 = vmatprep.subr.bf16.mxu0 %v707
        %791 = vmatpush2.bf16.msra.mxu0 %v706
        %792 = vmatprep.subr.bf16.mxu0 %v703
        %793 = vmatpush2.bf16.msra.mxu0 %v702
        %794 = vmatprep.subr.bf16.mxu0 %v699
        %795 = vmatpush2.bf16.msra.mxu0 %v698
        %796 = vmatprep.subr.bf16.mxu0 %v695
        %797 = vmatpush2.bf16.msra.mxu0 %v694
        %798 = vmatprep.subr.bf16.mxu0 %v691
        %799 = vmatpush2.bf16.msra.mxu0 %v690
        %800 = vmatprep.subr.bf16.mxu0 %v687
        %801 = vmatpush2.bf16.msra.mxu0 %v686
        %802 = vmatprep.subr.bf16.mxu0 %v683
        %803 = vmatpush2.bf16.msra.mxu0 %v682
        %804 = vmatprep.subr.bf16.mxu0 %v679
        %805 = vmatpush2.bf16.msra.mxu0 %v678
        %806 = vmatprep.mubr.bf16.mxu0 %v353
        %807 = vmatmul.mubr.bf16.gmra.mxu0 %v352
        %v808 = vpop.f32.mrf.mxu0
        %v809 = vadd.f32 %v437, %v808
        %v810 = vpop.f32.mrf.mxu0
        %v811 = vadd.f32 %v441, %v810
        %v812 = vpop.f32.mrf.mxu0
        %v813 = vadd.f32 %v437, %v812
        %v814 = vpop.f32.mrf.mxu0
        %v815 = vadd.f32 %v441, %v814
        %816 = vmatprep.mubr.bf16.mxu0 %v355
        %817 = vmatmul.mubr.bf16.gmra.mxu0 %v354
        %v818 = vpop.f32.mrf.mxu0
        %v819 = vadd.f32 %v437, %v818
        %v820 = vpop.f32.mrf.mxu0
        %v821 = vadd.f32 %v441, %v820
        %v822 = vpop.f32.mrf.mxu0
        %v823 = vadd.f32 %v437, %v822
        %v824 = vpop.f32.mrf.mxu0
        %v825 = vadd.f32 %v441, %v824
        %826 = vmatprep.mubr.bf16.mxu0 %v357
        %827 = vmatmul.mubr.bf16.gmra.mxu0 %v356
        %v828 = vpop.f32.mrf.mxu0
        %v829 = vadd.f32 %v437, %v828
        %v830 = vpop.f32.mrf.mxu0
        %v831 = vadd.f32 %v441, %v830
        %v832 = vpop.f32.mrf.mxu0
        %v833 = vadd.f32 %v437, %v832
        %v834 = vpop.f32.mrf.mxu0
        %v835 = vadd.f32 %v441, %v834
        %836 = vmatprep.mubr.bf16.mxu0 %v359
        %837 = vmatmul.mubr.bf16.gmra.mxu0 %v358
        %v838 = vpop.f32.mrf.mxu0
        %v839 = vadd.f32 %v437, %v838
        %v840 = vpop.f32.mrf.mxu0
        %v841 = vadd.f32 %v441, %v840
        %v842 = vpop.f32.mrf.mxu0
        %v843 = vadd.f32 %v437, %v842
        %v844 = vpop.f32.mrf.mxu0
        %v845 = vadd.f32 %v441, %v844
        %846 = vmatprep.mubr.bf16.mxu0 %v361
        %847 = vmatmul.mubr.bf16.gmra.mxu0 %v360
        %v848 = vpop.f32.mrf.mxu0
        %v849 = vadd.f32 %v437, %v848
        %v850 = vpop.f32.mrf.mxu0
        %v851 = vadd.f32 %v441, %v850
        %v852 = vpop.f32.mrf.mxu0
        %v853 = vadd.f32 %v437, %v852
        %v854 = vpop.f32.mrf.mxu0
        %v855 = vadd.f32 %v441, %v854
        %856 = vmatprep.mubr.bf16.mxu0 %v363
        %857 = vmatmul.mubr.bf16.gmra.mxu0 %v362
        %v858 = vpop.f32.mrf.mxu0
        %v859 = vadd.f32 %v437, %v858
        %v860 = vpop.f32.mrf.mxu0
        %v861 = vadd.f32 %v441, %v860
        %v862 = vpop.f32.mrf.mxu0
        %v863 = vadd.f32 %v437, %v862
        %v864 = vpop.f32.mrf.mxu0
        %v865 = vadd.f32 %v441, %v864
        %866 = vmatprep.mubr.bf16.mxu0 %v365
        %867 = vmatmul.mubr.bf16.gmra.mxu0 %v364
        %v868 = vpop.f32.mrf.mxu0
        %v869 = vadd.f32 %v437, %v868
        %v870 = vpop.f32.mrf.mxu0
        %v871 = vadd.f32 %v441, %v870
        %v872 = vpop.f32.mrf.mxu0
        %v873 = vadd.f32 %v437, %v872
        %v874 = vpop.f32.mrf.mxu0
        %v875 = vadd.f32 %v441, %v874
        %876 = vmatprep.mubr.bf16.mxu0 %v367
        %877 = vmatmul.mubr.bf16.gmra.mxu0 %v366
        %v878 = vpop.f32.mrf.mxu0
        %v879 = vadd.f32 %v437, %v878
        %v880 = vpop.f32.mrf.mxu0
        %v881 = vadd.f32 %v441, %v880
        %v882 = vpop.f32.mrf.mxu0
        %v883 = vadd.f32 %v437, %v882
        %v884 = vpop.f32.mrf.mxu0
        %v885 = vadd.f32 %v441, %v884
        %886 = vdwg.mxu0
        %887 = vmatprep.subr.bf16.mxu0 %v677
        %888 = vmatpush1.bf16.msra.mxu0 %v676
        %889 = vmatprep.subr.bf16.mxu0 %v673
        %890 = vmatpush1.bf16.msra.mxu0 %v672
        %891 = vmatprep.subr.bf16.mxu0 %v669
        %892 = vmatpush1.bf16.msra.mxu0 %v668
        %893 = vmatprep.subr.bf16.mxu0 %v665
        %894 = vmatpush1.bf16.msra.mxu0 %v664
        %895 = vmatprep.subr.bf16.mxu0 %v661
        %896 = vmatpush1.bf16.msra.mxu0 %v660
        %897 = vmatprep.subr.bf16.mxu0 %v657
        %898 = vmatpush1.bf16.msra.mxu0 %v656
        %899 = vmatprep.subr.bf16.mxu0 %v653
        %900 = vmatpush1.bf16.msra.mxu0 %v652
        %901 = vmatprep.subr.bf16.mxu0 %v649
        %902 = vmatpush1.bf16.msra.mxu0 %v648
        %903 = vmatprep.subr.bf16.mxu0 %v709
        %904 = vmatpush2.bf16.msra.mxu0 %v708
        %905 = vmatprep.subr.bf16.mxu0 %v705
        %906 = vmatpush2.bf16.msra.mxu0 %v704
        %907 = vmatprep.subr.bf16.mxu0 %v701
        %908 = vmatpush2.bf16.msra.mxu0 %v700
        %909 = vmatprep.subr.bf16.mxu0 %v697
        %910 = vmatpush2.bf16.msra.mxu0 %v696
        %911 = vmatprep.subr.bf16.mxu0 %v693
        %912 = vmatpush2.bf16.msra.mxu0 %v692
        %913 = vmatprep.subr.bf16.mxu0 %v689
        %914 = vmatpush2.bf16.msra.mxu0 %v688
        %915 = vmatprep.subr.bf16.mxu0 %v685
        %916 = vmatpush2.bf16.msra.mxu0 %v684
        %917 = vmatprep.subr.bf16.mxu0 %v681
        %918 = vmatpush2.bf16.msra.mxu0 %v680
        %919 = vmatprep.mubr.bf16.mxu0 %v353
        %920 = vmatmul.mubr.bf16.gmra.mxu0 %v352
        %v921 = vpop.f32.mrf.mxu0
        %v922 = vadd.f32 %v445, %v921
        %v923 = vpop.f32.mrf.mxu0
        %v924 = vadd.f32 %v449, %v923
        %v925 = vpop.f32.mrf.mxu0
        %v926 = vadd.f32 %v445, %v925
        %v927 = vpop.f32.mrf.mxu0
        %v928 = vadd.f32 %v449, %v927
        %929 = vmatprep.mubr.bf16.mxu0 %v355
        %930 = vmatmul.mubr.bf16.gmra.mxu0 %v354
        %v931 = vpop.f32.mrf.mxu0
        %v932 = vadd.f32 %v445, %v931
        %v933 = vpop.f32.mrf.mxu0
        %v934 = vadd.f32 %v449, %v933
        %v935 = vpop.f32.mrf.mxu0
        %v936 = vadd.f32 %v445, %v935
        %v937 = vpop.f32.mrf.mxu0
        %v938 = vadd.f32 %v449, %v937
        %939 = vmatprep.mubr.bf16.mxu0 %v357
        %940 = vmatmul.mubr.bf16.gmra.mxu0 %v356
        %v941 = vpop.f32.mrf.mxu0
        %v942 = vadd.f32 %v445, %v941
        %v943 = vpop.f32.mrf.mxu0
        %v944 = vadd.f32 %v449, %v943
        %v945 = vpop.f32.mrf.mxu0
        %v946 = vadd.f32 %v445, %v945
        %v947 = vpop.f32.mrf.mxu0
        %v948 = vadd.f32 %v449, %v947
        %949 = vmatprep.mubr.bf16.mxu0 %v359
        %950 = vmatmul.mubr.bf16.gmra.mxu0 %v358
        %v951 = vpop.f32.mrf.mxu0
        %v952 = vadd.f32 %v445, %v951
        %v953 = vpop.f32.mrf.mxu0
        %v954 = vadd.f32 %v449, %v953
        %v955 = vpop.f32.mrf.mxu0
        %v956 = vadd.f32 %v445, %v955
        %v957 = vpop.f32.mrf.mxu0
        %v958 = vadd.f32 %v449, %v957
        %959 = vmatprep.mubr.bf16.mxu0 %v361
        %960 = vmatmul.mubr.bf16.gmra.mxu0 %v360
        %v961 = vpop.f32.mrf.mxu0
        %v962 = vadd.f32 %v445, %v961
        %v963 = vpop.f32.mrf.mxu0
        %v964 = vadd.f32 %v449, %v963
        %v965 = vpop.f32.mrf.mxu0
        %v966 = vadd.f32 %v445, %v965
        %v967 = vpop.f32.mrf.mxu0
        %v968 = vadd.f32 %v449, %v967
        %969 = vmatprep.mubr.bf16.mxu0 %v363
        %970 = vmatmul.mubr.bf16.gmra.mxu0 %v362
        %v971 = vpop.f32.mrf.mxu0
        %v972 = vadd.f32 %v445, %v971
        %v973 = vpop.f32.mrf.mxu0
        %v974 = vadd.f32 %v449, %v973
        %v975 = vpop.f32.mrf.mxu0
        %v976 = vadd.f32 %v445, %v975
        %v977 = vpop.f32.mrf.mxu0
        %v978 = vadd.f32 %v449, %v977
        %979 = vmatprep.mubr.bf16.mxu0 %v365
        %980 = vmatmul.mubr.bf16.gmra.mxu0 %v364
        %v981 = vpop.f32.mrf.mxu0
        %v982 = vadd.f32 %v445, %v981
        %v983 = vpop.f32.mrf.mxu0
        %v984 = vadd.f32 %v449, %v983
        %v985 = vpop.f32.mrf.mxu0
        %v986 = vadd.f32 %v445, %v985
        %v987 = vpop.f32.mrf.mxu0
        %v988 = vadd.f32 %v449, %v987
        %989 = vmatprep.mubr.bf16.mxu0 %v367
        %990 = vmatmul.mubr.bf16.gmra.mxu0 %v366
        %v991 = vpop.f32.mrf.mxu0
        %v992 = vadd.f32 %v445, %v991
        %v993 = vpop.f32.mrf.mxu0
        %v994 = vadd.f32 %v449, %v993
        %v995 = vpop.f32.mrf.mxu0
        %v996 = vadd.f32 %v445, %v995
        %v997 = vpop.f32.mrf.mxu0
        %v998 = vadd.f32 %v449, %v997
        %999 = vdwg.mxu0
        %v1000 = vmax.f32 %v809, 0.0
        %v1001 = vmax.f32 %v811, 0.0
        %v1002 = vmax.f32 %v922, 0.0
        %v1003 = vmax.f32 %v924, 0.0
        %v1004 = vmax.f32 %v813, 0.0
        %v1005 = vmax.f32 %v815, 0.0
        %v1006 = vmax.f32 %v926, 0.0
        %v1007 = vmax.f32 %v928, 0.0
        %v1008 = vmax.f32 %v819, 0.0
        %v1009 = vmax.f32 %v821, 0.0
        %v1010 = vmax.f32 %v932, 0.0
        %v1011 = vmax.f32 %v934, 0.0
        %v1012 = vmax.f32 %v823, 0.0
        %v1013 = vmax.f32 %v825, 0.0
        %v1014 = vmax.f32 %v936, 0.0
        %v1015 = vmax.f32 %v938, 0.0
        %v1016 = vmax.f32 %v829, 0.0
        %v1017 = vmax.f32 %v831, 0.0
        %v1018 = vmax.f32 %v942, 0.0
        %v1019 = vmax.f32 %v944, 0.0
        %v1020 = vmax.f32 %v833, 0.0
        %v1021 = vmax.f32 %v835, 0.0
        %v1022 = vmax.f32 %v946, 0.0
        %v1023 = vmax.f32 %v948, 0.0
        %v1024 = vmax.f32 %v839, 0.0
        %v1025 = vmax.f32 %v841, 0.0
        %v1026 = vmax.f32 %v952, 0.0
        %v1027 = vmax.f32 %v954, 0.0
        %v1028 = vmax.f32 %v843, 0.0
        %v1029 = vmax.f32 %v845, 0.0
        %v1030 = vmax.f32 %v956, 0.0
        %v1031 = vmax.f32 %v958, 0.0
        %v1032 = vmax.f32 %v849, 0.0
        %v1033 = vmax.f32 %v851, 0.0
        %v1034 = vmax.f32 %v962, 0.0
        %v1035 = vmax.f32 %v964, 0.0
        %v1036 = vmax.f32 %v853, 0.0
        %v1037 = vmax.f32 %v855, 0.0
        %v1038 = vmax.f32 %v966, 0.0
        %v1039 = vmax.f32 %v968, 0.0
        %v1040 = vmax.f32 %v859, 0.0
        %v1041 = vmax.f32 %v861, 0.0
        %v1042 = vmax.f32 %v972, 0.0
        %v1043 = vmax.f32 %v974, 0.0
        %v1044 = vmax.f32 %v863, 0.0
        %v1045 = vmax.f32 %v865, 0.0
        %v1046 = vmax.f32 %v976, 0.0
        %v1047 = vmax.f32 %v978, 0.0
        %v1048 = vmax.f32 %v869, 0.0
        %v1049 = vmax.f32 %v871, 0.0
        %v1050 = vmax.f32 %v982, 0.0
        %v1051 = vmax.f32 %v984, 0.0
        %v1052 = vmax.f32 %v873, 0.0
        %v1053 = vmax.f32 %v875, 0.0
        %v1054 = vmax.f32 %v986, 0.0
        %v1055 = vmax.f32 %v988, 0.0
        %v1056 = vmax.f32 %v879, 0.0
        %v1057 = vmax.f32 %v881, 0.0
        %v1058 = vmax.f32 %v992, 0.0
        %v1059 = vmax.f32 %v994, 0.0
        %v1060 = vmax.f32 %v883, 0.0
        %v1061 = vmax.f32 %v885, 0.0
        %v1062 = vmax.f32 %v996, 0.0
        %v1063 = vmax.f32 %v998, 0.0
        %v1064 = vld [vmem:[#allocation2] sm:$0xff]
        %v1065 = vld [vmem:[#allocation2 + $0x8] sm:$0xff]
        %v1066 = vld [vmem:[#allocation2 + $0x10] sm:$0xff]
        %v1067 = vld [vmem:[#allocation2 + $0x18] sm:$0xff]
        %v1068 = vld [vmem:[#allocation2 + $0x20] sm:$0xff]
        %v1069 = vld [vmem:[#allocation2 + $0x28] sm:$0xff]
        %v1070 = vld [vmem:[#allocation2 + $0x30] sm:$0xff]
        %v1071 = vld [vmem:[#allocation2 + $0x38] sm:$0xff]
        %v1072 = vld [vmem:[#allocation2 + $0x40] sm:$0xff]
        %v1073 = vld [vmem:[#allocation2 + $0x48] sm:$0xff]
        %v1074 = vld [vmem:[#allocation2 + $0x50] sm:$0xff]
        %v1075 = vld [vmem:[#allocation2 + $0x58] sm:$0xff]
        %v1076 = vld [vmem:[#allocation2 + $0x60] sm:$0xff]
        %v1077 = vld [vmem:[#allocation2 + $0x68] sm:$0xff]
        %v1078 = vld [vmem:[#allocation2 + $0x70] sm:$0xff]
        %v1079 = vld [vmem:[#allocation2 + $0x78] sm:$0xff]
        %v1080 = vld [vmem:[#allocation2 + $0x80] sm:$0xff]
        %v1081 = vld [vmem:[#allocation2 + $0x88] sm:$0xff]
        %v1082 = vld [vmem:[#allocation2 + $0x90] sm:$0xff]
        %v1083 = vld [vmem:[#allocation2 + $0x98] sm:$0xff]
        %v1084 = vld [vmem:[#allocation2 + $0xa0] sm:$0xff]
        %v1085 = vld [vmem:[#allocation2 + $0xa8] sm:$0xff]
        %v1086 = vld [vmem:[#allocation2 + $0xb0] sm:$0xff]
        %v1087 = vld [vmem:[#allocation2 + $0xb8] sm:$0xff]
        %v1088 = vld [vmem:[#allocation2 + $0xc0] sm:$0xff]
        %v1089 = vld [vmem:[#allocation2 + $0xc8] sm:$0xff]
        %v1090 = vld [vmem:[#allocation2 + $0xd0] sm:$0xff]
        %v1091 = vld [vmem:[#allocation2 + $0xd8] sm:$0xff]
        %v1092 = vld [vmem:[#allocation2 + $0xe0] sm:$0xff]
        %v1093 = vld [vmem:[#allocation2 + $0xe8] sm:$0xff]
        %v1094 = vld [vmem:[#allocation2 + $0xf0] sm:$0xff]
        %v1095 = vld [vmem:[#allocation2 + $0xf8] sm:$0xff]
        %v1096 = vpack.c.bf16 %v1004, %v1000
        %v1097 = vpack.c.bf16 %v1005, %v1001
        %v1098 = vpack.c.bf16 %v1006, %v1002
        %v1099 = vpack.c.bf16 %v1007, %v1003
        %v1100 = vpack.c.bf16 %v1012, %v1008
        %v1101 = vpack.c.bf16 %v1013, %v1009
        %v1102 = vpack.c.bf16 %v1014, %v1010
        %v1103 = vpack.c.bf16 %v1015, %v1011
        %v1104 = vpack.c.bf16 %v1020, %v1016
        %v1105 = vpack.c.bf16 %v1021, %v1017
        %v1106 = vpack.c.bf16 %v1022, %v1018
        %v1107 = vpack.c.bf16 %v1023, %v1019
        %v1108 = vpack.c.bf16 %v1028, %v1024
        %v1109 = vpack.c.bf16 %v1029, %v1025
        %v1110 = vpack.c.bf16 %v1030, %v1026
        %v1111 = vpack.c.bf16 %v1031, %v1027
        %v1112 = vpack.c.bf16 %v1036, %v1032
        %v1113 = vpack.c.bf16 %v1037, %v1033
        %v1114 = vpack.c.bf16 %v1038, %v1034
        %v1115 = vpack.c.bf16 %v1039, %v1035
        %v1116 = vpack.c.bf16 %v1044, %v1040
        %v1117 = vpack.c.bf16 %v1045, %v1041
        %v1118 = vpack.c.bf16 %v1046, %v1042
        %v1119 = vpack.c.bf16 %v1047, %v1043
        %v1120 = vpack.c.bf16 %v1052, %v1048
        %v1121 = vpack.c.bf16 %v1053, %v1049
        %v1122 = vpack.c.bf16 %v1054, %v1050
        %v1123 = vpack.c.bf16 %v1055, %v1051
        %v1124 = vpack.c.bf16 %v1060, %v1056
        %v1125 = vpack.c.bf16 %v1061, %v1057
        %v1126 = vpack.c.bf16 %v1062, %v1058
        %v1127 = vpack.c.bf16 %v1063, %v1059
        %v1128 = vld [vmem:[#allocation9] sm:$0xff]
        %v1129 = vld [vmem:[#allocation9 + $0x8] sm:$0xff]
        %v1130 = vld [vmem:[#allocation9 + $0x10] sm:$0xff]
        %v1131 = vld [vmem:[#allocation9 + $0x18] sm:$0xff]
        %v1132 = vld [vmem:[#allocation9 + $0x20] sm:$0xff]
        %v1133 = vld [vmem:[#allocation9 + $0x28] sm:$0xff]
        %v1134 = vld [vmem:[#allocation9 + $0x30] sm:$0xff]
        %v1135 = vld [vmem:[#allocation9 + $0x38] sm:$0xff]
        %v1136 = vld [vmem:[#allocation9 + $0x40] sm:$0xff]
        %v1137 = vld [vmem:[#allocation9 + $0x48] sm:$0xff]
        %v1138 = vld [vmem:[#allocation9 + $0x50] sm:$0xff]
        %v1139 = vld [vmem:[#allocation9 + $0x58] sm:$0xff]
        %v1140 = vld [vmem:[#allocation9 + $0x60] sm:$0xff]
        %v1141 = vld [vmem:[#allocation9 + $0x68] sm:$0xff]
        %v1142 = vld [vmem:[#allocation9 + $0x70] sm:$0xff]
        %v1143 = vld [vmem:[#allocation9 + $0x78] sm:$0xff]
        %v1144 = vld [vmem:[#allocation9 + $0x80] sm:$0xff]
        %v1145 = vld [vmem:[#allocation9 + $0x88] sm:$0xff]
        %v1146 = vld [vmem:[#allocation9 + $0x90] sm:$0xff]
        %v1147 = vld [vmem:[#allocation9 + $0x98] sm:$0xff]
        %v1148 = vld [vmem:[#allocation9 + $0xa0] sm:$0xff]
        %v1149 = vld [vmem:[#allocation9 + $0xa8] sm:$0xff]
        %v1150 = vld [vmem:[#allocation9 + $0xb0] sm:$0xff]
        %v1151 = vld [vmem:[#allocation9 + $0xb8] sm:$0xff]
        %v1152 = vld [vmem:[#allocation9 + $0xc0] sm:$0xff]
        %v1153 = vld [vmem:[#allocation9 + $0xc8] sm:$0xff]
        %v1154 = vld [vmem:[#allocation9 + $0xd0] sm:$0xff]
        %v1155 = vld [vmem:[#allocation9 + $0xd8] sm:$0xff]
        %v1156 = vld [vmem:[#allocation9 + $0xe0] sm:$0xff]
        %v1157 = vld [vmem:[#allocation9 + $0xe8] sm:$0xff]
        %v1158 = vld [vmem:[#allocation9 + $0xf0] sm:$0xff]
        %v1159 = vld [vmem:[#allocation9 + $0xf8] sm:$0xff]
        %v1160 = vld [vmem:[#allocation9 + $0x100] sm:$0xff]
        %v1161 = vld [vmem:[#allocation9 + $0x108] sm:$0xff]
        %v1162 = vld [vmem:[#allocation9 + $0x110] sm:$0xff]
        %v1163 = vld [vmem:[#allocation9 + $0x118] sm:$0xff]
        %v1164 = vld [vmem:[#allocation9 + $0x120] sm:$0xff]
        %v1165 = vld [vmem:[#allocation9 + $0x128] sm:$0xff]
        %v1166 = vld [vmem:[#allocation9 + $0x130] sm:$0xff]
        %v1167 = vld [vmem:[#allocation9 + $0x138] sm:$0xff]
        %v1168 = vld [vmem:[#allocation9 + $0x140] sm:$0xff]
        %v1169 = vld [vmem:[#allocation9 + $0x148] sm:$0xff]
        %v1170 = vld [vmem:[#allocation9 + $0x150] sm:$0xff]
        %v1171 = vld [vmem:[#allocation9 + $0x158] sm:$0xff]
        %v1172 = vld [vmem:[#allocation9 + $0x160] sm:$0xff]
        %v1173 = vld [vmem:[#allocation9 + $0x168] sm:$0xff]
        %v1174 = vld [vmem:[#allocation9 + $0x170] sm:$0xff]
        %v1175 = vld [vmem:[#allocation9 + $0x178] sm:$0xff]
        %v1176 = vld [vmem:[#allocation9 + $0x180] sm:$0xff]
        %v1177 = vld [vmem:[#allocation9 + $0x188] sm:$0xff]
        %v1178 = vld [vmem:[#allocation9 + $0x190] sm:$0xff]
        %v1179 = vld [vmem:[#allocation9 + $0x198] sm:$0xff]
        %v1180 = vld [vmem:[#allocation9 + $0x1a0] sm:$0xff]
        %v1181 = vld [vmem:[#allocation9 + $0x1a8] sm:$0xff]
        %v1182 = vld [vmem:[#allocation9 + $0x1b0] sm:$0xff]
        %v1183 = vld [vmem:[#allocation9 + $0x1b8] sm:$0xff]
        %v1184 = vld [vmem:[#allocation9 + $0x1c0] sm:$0xff]
        %v1185 = vld [vmem:[#allocation9 + $0x1c8] sm:$0xff]
        %v1186 = vld [vmem:[#allocation9 + $0x1d0] sm:$0xff]
        %v1187 = vld [vmem:[#allocation9 + $0x1d8] sm:$0xff]
        %v1188 = vld [vmem:[#allocation9 + $0x1e0] sm:$0xff]
        %v1189 = vld [vmem:[#allocation9 + $0x1e8] sm:$0xff]
        %v1190 = vld [vmem:[#allocation9 + $0x1f0] sm:$0xff]
        %v1191 = vld [vmem:[#allocation9 + $0x1f8] sm:$0xff]
        %v1256 = vunpack.c.l.b16 %v1128
        %v1257 = vunpack.c.h.b16 %v1128
        %v1258 = vunpack.c.l.b16 %v1129
        %v1259 = vunpack.c.h.b16 %v1129
        %v1260 = vunpack.c.l.b16 %v1130
        %v1261 = vunpack.c.h.b16 %v1130
        %v1262 = vunpack.c.l.b16 %v1131
        %v1263 = vunpack.c.h.b16 %v1131
        %v1264 = vunpack.c.l.b16 %v1132
        %v1265 = vunpack.c.h.b16 %v1132
        %v1266 = vunpack.c.l.b16 %v1133
        %v1267 = vunpack.c.h.b16 %v1133
        %v1268 = vunpack.c.l.b16 %v1134
        %v1269 = vunpack.c.h.b16 %v1134
        %v1270 = vunpack.c.l.b16 %v1135
        %v1271 = vunpack.c.h.b16 %v1135
        %v1272 = vunpack.c.l.b16 %v1136
        %v1273 = vunpack.c.h.b16 %v1136
        %v1274 = vunpack.c.l.b16 %v1137
        %v1275 = vunpack.c.h.b16 %v1137
        %v1276 = vunpack.c.l.b16 %v1138
        %v1277 = vunpack.c.h.b16 %v1138
        %v1278 = vunpack.c.l.b16 %v1139
        %v1279 = vunpack.c.h.b16 %v1139
        %v1280 = vunpack.c.l.b16 %v1140
        %v1281 = vunpack.c.h.b16 %v1140
        %v1282 = vunpack.c.l.b16 %v1141
        %v1283 = vunpack.c.h.b16 %v1141
        %v1284 = vunpack.c.l.b16 %v1142
        %v1285 = vunpack.c.h.b16 %v1142
        %v1286 = vunpack.c.l.b16 %v1143
        %v1287 = vunpack.c.h.b16 %v1143
        %v1288 = vunpack.c.l.b16 %v1144
        %v1289 = vunpack.c.h.b16 %v1144
        %v1290 = vunpack.c.l.b16 %v1145
        %v1291 = vunpack.c.h.b16 %v1145
        %v1292 = vunpack.c.l.b16 %v1146
        %v1293 = vunpack.c.h.b16 %v1146
        %v1294 = vunpack.c.l.b16 %v1147
        %v1295 = vunpack.c.h.b16 %v1147
        %v1296 = vunpack.c.l.b16 %v1148
        %v1297 = vunpack.c.h.b16 %v1148
        %v1298 = vunpack.c.l.b16 %v1149
        %v1299 = vunpack.c.h.b16 %v1149
        %v1300 = vunpack.c.l.b16 %v1150
        %v1301 = vunpack.c.h.b16 %v1150
        %v1302 = vunpack.c.l.b16 %v1151
        %v1303 = vunpack.c.h.b16 %v1151
        %v1304 = vunpack.c.l.b16 %v1152
        %v1305 = vunpack.c.h.b16 %v1152
        %v1306 = vunpack.c.l.b16 %v1153
        %v1307 = vunpack.c.h.b16 %v1153
        %v1308 = vunpack.c.l.b16 %v1154
        %v1309 = vunpack.c.h.b16 %v1154
        %v1310 = vunpack.c.l.b16 %v1155
        %v1311 = vunpack.c.h.b16 %v1155
        %v1312 = vunpack.c.l.b16 %v1156
        %v1313 = vunpack.c.h.b16 %v1156
        %v1314 = vunpack.c.l.b16 %v1157
        %v1315 = vunpack.c.h.b16 %v1157
        %v1316 = vunpack.c.l.b16 %v1158
        %v1317 = vunpack.c.h.b16 %v1158
        %v1318 = vunpack.c.l.b16 %v1159
        %v1319 = vunpack.c.h.b16 %v1159
        %v1320 = vunpack.c.l.b16 %v1160
        %v1321 = vunpack.c.h.b16 %v1160
        %v1322 = vunpack.c.l.b16 %v1161
        %v1323 = vunpack.c.h.b16 %v1161
        %v1324 = vunpack.c.l.b16 %v1162
        %v1325 = vunpack.c.h.b16 %v1162
        %v1326 = vunpack.c.l.b16 %v1163
        %v1327 = vunpack.c.h.b16 %v1163
        %v1328 = vunpack.c.l.b16 %v1164
        %v1329 = vunpack.c.h.b16 %v1164
        %v1330 = vunpack.c.l.b16 %v1165
        %v1331 = vunpack.c.h.b16 %v1165
        %v1332 = vunpack.c.l.b16 %v1166
        %v1333 = vunpack.c.h.b16 %v1166
        %v1334 = vunpack.c.l.b16 %v1167
        %v1335 = vunpack.c.h.b16 %v1167
        %v1336 = vunpack.c.l.b16 %v1168
        %v1337 = vunpack.c.h.b16 %v1168
        %v1338 = vunpack.c.l.b16 %v1169
        %v1339 = vunpack.c.h.b16 %v1169
        %v1340 = vunpack.c.l.b16 %v1170
        %v1341 = vunpack.c.h.b16 %v1170
        %v1342 = vunpack.c.l.b16 %v1171
        %v1343 = vunpack.c.h.b16 %v1171
        %v1344 = vunpack.c.l.b16 %v1172
        %v1345 = vunpack.c.h.b16 %v1172
        %v1346 = vunpack.c.l.b16 %v1173
        %v1347 = vunpack.c.h.b16 %v1173
        %v1348 = vunpack.c.l.b16 %v1174
        %v1349 = vunpack.c.h.b16 %v1174
        %v1350 = vunpack.c.l.b16 %v1175
        %v1351 = vunpack.c.h.b16 %v1175
        %v1352 = vunpack.c.l.b16 %v1176
        %v1353 = vunpack.c.h.b16 %v1176
        %v1354 = vunpack.c.l.b16 %v1177
        %v1355 = vunpack.c.h.b16 %v1177
        %v1356 = vunpack.c.l.b16 %v1178
        %v1357 = vunpack.c.h.b16 %v1178
        %v1358 = vunpack.c.l.b16 %v1179
        %v1359 = vunpack.c.h.b16 %v1179
        %v1360 = vunpack.c.l.b16 %v1180
        %v1361 = vunpack.c.h.b16 %v1180
        %v1362 = vunpack.c.l.b16 %v1181
        %v1363 = vunpack.c.h.b16 %v1181
        %v1364 = vunpack.c.l.b16 %v1182
        %v1365 = vunpack.c.h.b16 %v1182
        %v1366 = vunpack.c.l.b16 %v1183
        %v1367 = vunpack.c.h.b16 %v1183
        %v1368 = vunpack.c.l.b16 %v1184
        %v1369 = vunpack.c.h.b16 %v1184
        %v1370 = vunpack.c.l.b16 %v1185
        %v1371 = vunpack.c.h.b16 %v1185
        %v1372 = vunpack.c.l.b16 %v1186
        %v1373 = vunpack.c.h.b16 %v1186
        %v1374 = vunpack.c.l.b16 %v1187
        %v1375 = vunpack.c.h.b16 %v1187
        %v1376 = vunpack.c.l.b16 %v1188
        %v1377 = vunpack.c.h.b16 %v1188
        %v1378 = vunpack.c.l.b16 %v1189
        %v1379 = vunpack.c.h.b16 %v1189
        %v1380 = vunpack.c.l.b16 %v1190
        %v1381 = vunpack.c.h.b16 %v1190
        %v1382 = vunpack.c.l.b16 %v1191
        %v1383 = vunpack.c.h.b16 %v1191
        %v1384 = vpack.c.b16 %v1258, %v1256
        %v1385 = vpack.c.b16 %v1259, %v1257
        %v1386 = vpack.c.b16 %v1262, %v1260
        %v1387 = vpack.c.b16 %v1263, %v1261
        %v1388 = vpack.c.b16 %v1266, %v1264
        %v1389 = vpack.c.b16 %v1267, %v1265
        %v1390 = vpack.c.b16 %v1270, %v1268
        %v1391 = vpack.c.b16 %v1271, %v1269
        %v1392 = vpack.c.b16 %v1274, %v1272
        %v1393 = vpack.c.b16 %v1275, %v1273
        %v1394 = vpack.c.b16 %v1278, %v1276
        %v1395 = vpack.c.b16 %v1279, %v1277
        %v1396 = vpack.c.b16 %v1282, %v1280
        %v1397 = vpack.c.b16 %v1283, %v1281
        %v1398 = vpack.c.b16 %v1286, %v1284
        %v1399 = vpack.c.b16 %v1287, %v1285
        %v1400 = vpack.c.b16 %v1290, %v1288
        %v1401 = vpack.c.b16 %v1291, %v1289
        %v1402 = vpack.c.b16 %v1294, %v1292
        %v1403 = vpack.c.b16 %v1295, %v1293
        %v1404 = vpack.c.b16 %v1298, %v1296
        %v1405 = vpack.c.b16 %v1299, %v1297
        %v1406 = vpack.c.b16 %v1302, %v1300
        %v1407 = vpack.c.b16 %v1303, %v1301
        %v1408 = vpack.c.b16 %v1306, %v1304
        %v1409 = vpack.c.b16 %v1307, %v1305
        %v1410 = vpack.c.b16 %v1310, %v1308
        %v1411 = vpack.c.b16 %v1311, %v1309
        %v1412 = vpack.c.b16 %v1314, %v1312
        %v1413 = vpack.c.b16 %v1315, %v1313
        %v1414 = vpack.c.b16 %v1318, %v1316
        %v1415 = vpack.c.b16 %v1319, %v1317
        %v1416 = vpack.c.b16 %v1322, %v1320
        %v1417 = vpack.c.b16 %v1323, %v1321
        %v1418 = vpack.c.b16 %v1326, %v1324
        %v1419 = vpack.c.b16 %v1327, %v1325
        %v1420 = vpack.c.b16 %v1330, %v1328
        %v1421 = vpack.c.b16 %v1331, %v1329
        %v1422 = vpack.c.b16 %v1334, %v1332
        %v1423 = vpack.c.b16 %v1335, %v1333
        %v1424 = vpack.c.b16 %v1338, %v1336
        %v1425 = vpack.c.b16 %v1339, %v1337
        %v1426 = vpack.c.b16 %v1342, %v1340
        %v1427 = vpack.c.b16 %v1343, %v1341
        %v1428 = vpack.c.b16 %v1346, %v1344
        %v1429 = vpack.c.b16 %v1347, %v1345
        %v1430 = vpack.c.b16 %v1350, %v1348
        %v1431 = vpack.c.b16 %v1351, %v1349
        %v1432 = vpack.c.b16 %v1354, %v1352
        %v1433 = vpack.c.b16 %v1355, %v1353
        %v1434 = vpack.c.b16 %v1358, %v1356
        %v1435 = vpack.c.b16 %v1359, %v1357
        %v1436 = vpack.c.b16 %v1362, %v1360
        %v1437 = vpack.c.b16 %v1363, %v1361
        %v1438 = vpack.c.b16 %v1366, %v1364
        %v1439 = vpack.c.b16 %v1367, %v1365
        %v1440 = vpack.c.b16 %v1370, %v1368
        %v1441 = vpack.c.b16 %v1371, %v1369
        %v1442 = vpack.c.b16 %v1374, %v1372
        %v1443 = vpack.c.b16 %v1375, %v1373
        %v1444 = vpack.c.b16 %v1378, %v1376
        %v1445 = vpack.c.b16 %v1379, %v1377
        %v1446 = vpack.c.b16 %v1382, %v1380
        %v1447 = vpack.c.b16 %v1383, %v1381
        %1512 = vmatprep.subr.bf16.mxu0 %v1399
        %1513 = vmatpush1.bf16.msra.mxu0 %v1398
        %1514 = vmatprep.subr.bf16.mxu0 %v1397
        %1515 = vmatpush1.bf16.msra.mxu0 %v1396
        %1516 = vmatprep.subr.bf16.mxu0 %v1395
        %1517 = vmatpush1.bf16.msra.mxu0 %v1394
        %1518 = vmatprep.subr.bf16.mxu0 %v1393
        %1519 = vmatpush1.bf16.msra.mxu0 %v1392
        %1520 = vmatprep.subr.bf16.mxu0 %v1391
        %1521 = vmatpush1.bf16.msra.mxu0 %v1390
        %1522 = vmatprep.subr.bf16.mxu0 %v1389
        %1523 = vmatpush1.bf16.msra.mxu0 %v1388
        %1524 = vmatprep.subr.bf16.mxu0 %v1387
        %1525 = vmatpush1.bf16.msra.mxu0 %v1386
        %1526 = vmatprep.subr.bf16.mxu0 %v1385
        %1527 = vmatpush1.bf16.msra.mxu0 %v1384
        %1528 = vmatprep.subr.bf16.mxu0 %v1415
        %1529 = vmatpush2.bf16.msra.mxu0 %v1414
        %1530 = vmatprep.subr.bf16.mxu0 %v1413
        %1531 = vmatpush2.bf16.msra.mxu0 %v1412
        %1532 = vmatprep.subr.bf16.mxu0 %v1411
        %1533 = vmatpush2.bf16.msra.mxu0 %v1410
        %1534 = vmatprep.subr.bf16.mxu0 %v1409
        %1535 = vmatpush2.bf16.msra.mxu0 %v1408
        %1536 = vmatprep.subr.bf16.mxu0 %v1407
        %1537 = vmatpush2.bf16.msra.mxu0 %v1406
        %1538 = vmatprep.subr.bf16.mxu0 %v1405
        %1539 = vmatpush2.bf16.msra.mxu0 %v1404
        %1540 = vmatprep.subr.bf16.mxu0 %v1403
        %1541 = vmatpush2.bf16.msra.mxu0 %v1402
        %1542 = vmatprep.subr.bf16.mxu0 %v1401
        %1543 = vmatpush2.bf16.msra.mxu0 %v1400
        %1544 = vmatprep.mubr.bf16.mxu0 %v1097
        %1545 = vmatmul.mubr.bf16.gmra.mxu0 %v1096
        %v1546 = vpop.f32.mrf.mxu0
        %v1547 = vadd.f32 0.0, %v1546
        %v1548 = vpop.f32.mrf.mxu0
        %v1549 = vadd.f32 0.0, %v1548
        %v1550 = vpop.f32.mrf.mxu0
        %v1551 = vadd.f32 0.0, %v1550
        %v1552 = vpop.f32.mrf.mxu0
        %v1553 = vadd.f32 0.0, %v1552
        %1554 = vmatprep.mubr.bf16.mxu0 %v1101
        %1555 = vmatmul.mubr.bf16.gmra.mxu0 %v1100
        %v1556 = vpop.f32.mrf.mxu0
        %v1557 = vadd.f32 0.0, %v1556
        %v1558 = vpop.f32.mrf.mxu0
        %v1559 = vadd.f32 0.0, %v1558
        %v1560 = vpop.f32.mrf.mxu0
        %v1561 = vadd.f32 0.0, %v1560
        %v1562 = vpop.f32.mrf.mxu0
        %v1563 = vadd.f32 0.0, %v1562
        %1564 = vmatprep.mubr.bf16.mxu0 %v1105
        %1565 = vmatmul.mubr.bf16.gmra.mxu0 %v1104
        %v1566 = vpop.f32.mrf.mxu0
        %v1567 = vadd.f32 0.0, %v1566
        %v1568 = vpop.f32.mrf.mxu0
        %v1569 = vadd.f32 0.0, %v1568
        %v1570 = vpop.f32.mrf.mxu0
        %v1571 = vadd.f32 0.0, %v1570
        %v1572 = vpop.f32.mrf.mxu0
        %v1573 = vadd.f32 0.0, %v1572
        %1574 = vmatprep.mubr.bf16.mxu0 %v1109
        %1575 = vmatmul.mubr.bf16.gmra.mxu0 %v1108
        %v1576 = vpop.f32.mrf.mxu0
        %v1577 = vadd.f32 0.0, %v1576
        %v1578 = vpop.f32.mrf.mxu0
        %v1579 = vadd.f32 0.0, %v1578
        %v1580 = vpop.f32.mrf.mxu0
        %v1581 = vadd.f32 0.0, %v1580
        %v1582 = vpop.f32.mrf.mxu0
        %v1583 = vadd.f32 0.0, %v1582
        %1584 = vmatprep.mubr.bf16.mxu0 %v1113
        %1585 = vmatmul.mubr.bf16.gmra.mxu0 %v1112
        %v1586 = vpop.f32.mrf.mxu0
        %v1587 = vadd.f32 0.0, %v1586
        %v1588 = vpop.f32.mrf.mxu0
        %v1589 = vadd.f32 0.0, %v1588
        %v1590 = vpop.f32.mrf.mxu0
        %v1591 = vadd.f32 0.0, %v1590
        %v1592 = vpop.f32.mrf.mxu0
        %v1593 = vadd.f32 0.0, %v1592
        %1594 = vmatprep.mubr.bf16.mxu0 %v1117
        %1595 = vmatmul.mubr.bf16.gmra.mxu0 %v1116
        %v1596 = vpop.f32.mrf.mxu0
        %v1597 = vadd.f32 0.0, %v1596
        %v1598 = vpop.f32.mrf.mxu0
        %v1599 = vadd.f32 0.0, %v1598
        %v1600 = vpop.f32.mrf.mxu0
        %v1601 = vadd.f32 0.0, %v1600
        %v1602 = vpop.f32.mrf.mxu0
        %v1603 = vadd.f32 0.0, %v1602
        %1604 = vmatprep.mubr.bf16.mxu0 %v1121
        %1605 = vmatmul.mubr.bf16.gmra.mxu0 %v1120
        %v1606 = vpop.f32.mrf.mxu0
        %v1607 = vadd.f32 0.0, %v1606
        %v1608 = vpop.f32.mrf.mxu0
        %v1609 = vadd.f32 0.0, %v1608
        %v1610 = vpop.f32.mrf.mxu0
        %v1611 = vadd.f32 0.0, %v1610
        %v1612 = vpop.f32.mrf.mxu0
        %v1613 = vadd.f32 0.0, %v1612
        %1614 = vmatprep.mubr.bf16.mxu0 %v1125
        %1615 = vmatmul.mubr.bf16.gmra.mxu0 %v1124
        %v1616 = vpop.f32.mrf.mxu0
        %v1617 = vadd.f32 0.0, %v1616
        %v1618 = vpop.f32.mrf.mxu0
        %v1619 = vadd.f32 0.0, %v1618
        %v1620 = vpop.f32.mrf.mxu0
        %v1621 = vadd.f32 0.0, %v1620
        %v1622 = vpop.f32.mrf.mxu0
        %v1623 = vadd.f32 0.0, %v1622
        %1624 = vdwg.mxu0
        %1625 = vmatprep.subr.bf16.mxu0 %v1431
        %1626 = vmatpush1.bf16.msra.mxu0 %v1430
        %1627 = vmatprep.subr.bf16.mxu0 %v1429
        %1628 = vmatpush1.bf16.msra.mxu0 %v1428
        %1629 = vmatprep.subr.bf16.mxu0 %v1427
        %1630 = vmatpush1.bf16.msra.mxu0 %v1426
        %1631 = vmatprep.subr.bf16.mxu0 %v1425
        %1632 = vmatpush1.bf16.msra.mxu0 %v1424
        %1633 = vmatprep.subr.bf16.mxu0 %v1423
        %1634 = vmatpush1.bf16.msra.mxu0 %v1422
        %1635 = vmatprep.subr.bf16.mxu0 %v1421
        %1636 = vmatpush1.bf16.msra.mxu0 %v1420
        %1637 = vmatprep.subr.bf16.mxu0 %v1419
        %1638 = vmatpush1.bf16.msra.mxu0 %v1418
        %1639 = vmatprep.subr.bf16.mxu0 %v1417
        %1640 = vmatpush1.bf16.msra.mxu0 %v1416
        %1641 = vmatprep.subr.bf16.mxu0 %v1447
        %1642 = vmatpush2.bf16.msra.mxu0 %v1446
        %1643 = vmatprep.subr.bf16.mxu0 %v1445
        %1644 = vmatpush2.bf16.msra.mxu0 %v1444
        %1645 = vmatprep.subr.bf16.mxu0 %v1443
        %1646 = vmatpush2.bf16.msra.mxu0 %v1442
        %1647 = vmatprep.subr.bf16.mxu0 %v1441
        %1648 = vmatpush2.bf16.msra.mxu0 %v1440
        %1649 = vmatprep.subr.bf16.mxu0 %v1439
        %1650 = vmatpush2.bf16.msra.mxu0 %v1438
        %1651 = vmatprep.subr.bf16.mxu0 %v1437
        %1652 = vmatpush2.bf16.msra.mxu0 %v1436
        %1653 = vmatprep.subr.bf16.mxu0 %v1435
        %1654 = vmatpush2.bf16.msra.mxu0 %v1434
        %1655 = vmatprep.subr.bf16.mxu0 %v1433
        %1656 = vmatpush2.bf16.msra.mxu0 %v1432
        %1657 = vmatprep.mubr.bf16.mxu0 %v1099
        %1658 = vmatmul.mubr.bf16.gmra.mxu0 %v1098
        %v1659 = vpop.f32.mrf.mxu0
        %v1660 = vadd.f32 %v1547, %v1659
        %v1661 = vpop.f32.mrf.mxu0
        %v1662 = vadd.f32 %v1549, %v1661
        %v1663 = vpop.f32.mrf.mxu0
        %v1664 = vadd.f32 %v1551, %v1663
        %v1665 = vpop.f32.mrf.mxu0
        %v1666 = vadd.f32 %v1553, %v1665
        %1667 = vmatprep.mubr.bf16.mxu0 %v1103
        %1668 = vmatmul.mubr.bf16.gmra.mxu0 %v1102
        %v1669 = vpop.f32.mrf.mxu0
        %v1670 = vadd.f32 %v1557, %v1669
        %v1671 = vpop.f32.mrf.mxu0
        %v1672 = vadd.f32 %v1559, %v1671
        %v1673 = vpop.f32.mrf.mxu0
        %v1674 = vadd.f32 %v1561, %v1673
        %v1675 = vpop.f32.mrf.mxu0
        %v1676 = vadd.f32 %v1563, %v1675
        %1677 = vmatprep.mubr.bf16.mxu0 %v1107
        %1678 = vmatmul.mubr.bf16.gmra.mxu0 %v1106
        %v1679 = vpop.f32.mrf.mxu0
        %v1680 = vadd.f32 %v1567, %v1679
        %v1681 = vpop.f32.mrf.mxu0
        %v1682 = vadd.f32 %v1569, %v1681
        %v1683 = vpop.f32.mrf.mxu0
        %v1684 = vadd.f32 %v1571, %v1683
        %v1685 = vpop.f32.mrf.mxu0
        %v1686 = vadd.f32 %v1573, %v1685
        %1687 = vmatprep.mubr.bf16.mxu0 %v1111
        %1688 = vmatmul.mubr.bf16.gmra.mxu0 %v1110
        %v1689 = vpop.f32.mrf.mxu0
        %v1690 = vadd.f32 %v1577, %v1689
        %v1691 = vpop.f32.mrf.mxu0
        %v1692 = vadd.f32 %v1579, %v1691
        %v1693 = vpop.f32.mrf.mxu0
        %v1694 = vadd.f32 %v1581, %v1693
        %v1695 = vpop.f32.mrf.mxu0
        %v1696 = vadd.f32 %v1583, %v1695
        %1697 = vmatprep.mubr.bf16.mxu0 %v1115
        %1698 = vmatmul.mubr.bf16.gmra.mxu0 %v1114
        %v1699 = vpop.f32.mrf.mxu0
        %v1700 = vadd.f32 %v1587, %v1699
        %v1701 = vpop.f32.mrf.mxu0
        %v1702 = vadd.f32 %v1589, %v1701
        %v1703 = vpop.f32.mrf.mxu0
        %v1704 = vadd.f32 %v1591, %v1703
        %v1705 = vpop.f32.mrf.mxu0
        %v1706 = vadd.f32 %v1593, %v1705
        %1707 = vmatprep.mubr.bf16.mxu0 %v1119
        %1708 = vmatmul.mubr.bf16.gmra.mxu0 %v1118
        %v1709 = vpop.f32.mrf.mxu0
        %v1710 = vadd.f32 %v1597, %v1709
        %v1711 = vpop.f32.mrf.mxu0
        %v1712 = vadd.f32 %v1599, %v1711
        %v1713 = vpop.f32.mrf.mxu0
        %v1714 = vadd.f32 %v1601, %v1713
        %v1715 = vpop.f32.mrf.mxu0
        %v1716 = vadd.f32 %v1603, %v1715
        %1717 = vmatprep.mubr.bf16.mxu0 %v1123
        %1718 = vmatmul.mubr.bf16.gmra.mxu0 %v1122
        %v1719 = vpop.f32.mrf.mxu0
        %v1720 = vadd.f32 %v1607, %v1719
        %v1721 = vpop.f32.mrf.mxu0
        %v1722 = vadd.f32 %v1609, %v1721
        %v1723 = vpop.f32.mrf.mxu0
        %v1724 = vadd.f32 %v1611, %v1723
        %v1725 = vpop.f32.mrf.mxu0
        %v1726 = vadd.f32 %v1613, %v1725
        %1727 = vmatprep.mubr.bf16.mxu0 %v1127
        %1728 = vmatmul.mubr.bf16.gmra.mxu0 %v1126
        %v1729 = vpop.f32.mrf.mxu0
        %v1730 = vadd.f32 %v1617, %v1729
        %v1731 = vpop.f32.mrf.mxu0
        %v1732 = vadd.f32 %v1619, %v1731
        %v1733 = vpop.f32.mrf.mxu0
        %v1734 = vadd.f32 %v1621, %v1733
        %v1735 = vpop.f32.mrf.mxu0
        %v1736 = vadd.f32 %v1623, %v1735
        %1737 = vdwg.mxu0
        %v1738 = vadd.f32 %v1064, %v1660
        %v1739 = vadd.f32 %v1065, %v1662
        %v1740 = vadd.f32 %v1066, %v1664
        %v1741 = vadd.f32 %v1067, %v1666
        %v1742 = vadd.f32 %v1068, %v1670
        %v1743 = vadd.f32 %v1069, %v1672
        %v1744 = vadd.f32 %v1070, %v1674
        %v1745 = vadd.f32 %v1071, %v1676
        %v1746 = vadd.f32 %v1072, %v1680
        %v1747 = vadd.f32 %v1073, %v1682
        %v1748 = vadd.f32 %v1074, %v1684
        %v1749 = vadd.f32 %v1075, %v1686
        %v1750 = vadd.f32 %v1076, %v1690
        %v1751 = vadd.f32 %v1077, %v1692
        %v1752 = vadd.f32 %v1078, %v1694
        %v1753 = vadd.f32 %v1079, %v1696
        %v1754 = vadd.f32 %v1080, %v1700
        %v1755 = vadd.f32 %v1081, %v1702
        %v1756 = vadd.f32 %v1082, %v1704
        %v1757 = vadd.f32 %v1083, %v1706
        %v1758 = vadd.f32 %v1084, %v1710
        %v1759 = vadd.f32 %v1085, %v1712
        %v1760 = vadd.f32 %v1086, %v1714
        %v1761 = vadd.f32 %v1087, %v1716
        %v1762 = vadd.f32 %v1088, %v1720
        %v1763 = vadd.f32 %v1089, %v1722
        %v1764 = vadd.f32 %v1090, %v1724
        %v1765 = vadd.f32 %v1091, %v1726
        %v1766 = vadd.f32 %v1092, %v1730
        %v1767 = vadd.f32 %v1093, %v1732
        %v1768 = vadd.f32 %v1094, %v1734
        %v1769 = vadd.f32 %v1095, %v1736
        %1770 = vst [vmem:[#allocation2] sm:$0xff] %v1738
        %1771 = vst [vmem:[#allocation2 + $0x8] sm:$0xff] %v1739
        %1772 = vst [vmem:[#allocation2 + $0x10] sm:$0xff] %v1740
        %1773 = vst [vmem:[#allocation2 + $0x18] sm:$0xff] %v1741
        %1774 = vst [vmem:[#allocation2 + $0x20] sm:$0xff] %v1742
        %1775 = vst [vmem:[#allocation2 + $0x28] sm:$0xff] %v1743
        %1776 = vst [vmem:[#allocation2 + $0x30] sm:$0xff] %v1744
        %1777 = vst [vmem:[#allocation2 + $0x38] sm:$0xff] %v1745
        %1778 = vst [vmem:[#allocation2 + $0x40] sm:$0xff] %v1746
        %1779 = vst [vmem:[#allocation2 + $0x48] sm:$0xff] %v1747
        %1780 = vst [vmem:[#allocation2 + $0x50] sm:$0xff] %v1748
        %1781 = vst [vmem:[#allocation2 + $0x58] sm:$0xff] %v1749
        %1782 = vst [vmem:[#allocation2 + $0x60] sm:$0xff] %v1750
        %1783 = vst [vmem:[#allocation2 + $0x68] sm:$0xff] %v1751
        %1784 = vst [vmem:[#allocation2 + $0x70] sm:$0xff] %v1752
        %1785 = vst [vmem:[#allocation2 + $0x78] sm:$0xff] %v1753
        %1786 = vst [vmem:[#allocation2 + $0x80] sm:$0xff] %v1754
        %1787 = vst [vmem:[#allocation2 + $0x88] sm:$0xff] %v1755
        %1788 = vst [vmem:[#allocation2 + $0x90] sm:$0xff] %v1756
        %1789 = vst [vmem:[#allocation2 + $0x98] sm:$0xff] %v1757
        %1790 = vst [vmem:[#allocation2 + $0xa0] sm:$0xff] %v1758
        %1791 = vst [vmem:[#allocation2 + $0xa8] sm:$0xff] %v1759
        %1792 = vst [vmem:[#allocation2 + $0xb0] sm:$0xff] %v1760
        %1793 = vst [vmem:[#allocation2 + $0xb8] sm:$0xff] %v1761
        %1794 = vst [vmem:[#allocation2 + $0xc0] sm:$0xff] %v1762
        %1795 = vst [vmem:[#allocation2 + $0xc8] sm:$0xff] %v1763
        %1796 = vst [vmem:[#allocation2 + $0xd0] sm:$0xff] %v1764
        %1797 = vst [vmem:[#allocation2 + $0xd8] sm:$0xff] %v1765
        %1798 = vst [vmem:[#allocation2 + $0xe0] sm:$0xff] %v1766
        %1799 = vst [vmem:[#allocation2 + $0xe8] sm:$0xff] %v1767
        %1800 = vst [vmem:[#allocation2 + $0xf0] sm:$0xff] %v1768
        %1801 = vst [vmem:[#allocation2 + $0xf8] sm:$0xff] %v1769
        %v1802 = vld [vmem:[#allocation2] sm:$0xff]
        %v1803 = vld [vmem:[#allocation2 + $0x8] sm:$0xff]
        %v1804 = vld [vmem:[#allocation2 + $0x10] sm:$0xff]
        %v1805 = vld [vmem:[#allocation2 + $0x18] sm:$0xff]
        %v1806 = vld [vmem:[#allocation2 + $0x20] sm:$0xff]
        %v1807 = vld [vmem:[#allocation2 + $0x28] sm:$0xff]
        %v1808 = vld [vmem:[#allocation2 + $0x30] sm:$0xff]
        %v1809 = vld [vmem:[#allocation2 + $0x38] sm:$0xff]
        %v1810 = vld [vmem:[#allocation2 + $0x40] sm:$0xff]
        %v1811 = vld [vmem:[#allocation2 + $0x48] sm:$0xff]
        %v1812 = vld [vmem:[#allocation2 + $0x50] sm:$0xff]
        %v1813 = vld [vmem:[#allocation2 + $0x58] sm:$0xff]
        %v1814 = vld [vmem:[#allocation2 + $0x60] sm:$0xff]
        %v1815 = vld [vmem:[#allocation2 + $0x68] sm:$0xff]
        %v1816 = vld [vmem:[#allocation2 + $0x70] sm:$0xff]
        %v1817 = vld [vmem:[#allocation2 + $0x78] sm:$0xff]
        %v1818 = vld [vmem:[#allocation2 + $0x80] sm:$0xff]
        %v1819 = vld [vmem:[#allocation2 + $0x88] sm:$0xff]
        %v1820 = vld [vmem:[#allocation2 + $0x90] sm:$0xff]
        %v1821 = vld [vmem:[#allocation2 + $0x98] sm:$0xff]
        %v1822 = vld [vmem:[#allocation2 + $0xa0] sm:$0xff]
        %v1823 = vld [vmem:[#allocation2 + $0xa8] sm:$0xff]
        %v1824 = vld [vmem:[#allocation2 + $0xb0] sm:$0xff]
        %v1825 = vld [vmem:[#allocation2 + $0xb8] sm:$0xff]
        %v1826 = vld [vmem:[#allocation2 + $0xc0] sm:$0xff]
        %v1827 = vld [vmem:[#allocation2 + $0xc8] sm:$0xff]
        %v1828 = vld [vmem:[#allocation2 + $0xd0] sm:$0xff]
        %v1829 = vld [vmem:[#allocation2 + $0xd8] sm:$0xff]
        %v1830 = vld [vmem:[#allocation2 + $0xe0] sm:$0xff]
        %v1831 = vld [vmem:[#allocation2 + $0xe8] sm:$0xff]
        %v1832 = vld [vmem:[#allocation2 + $0xf0] sm:$0xff]
        %v1833 = vld [vmem:[#allocation2 + $0xf8] sm:$0xff]
        %v1834 = vld [vmem:[%s4] sm:$0x3]
        %v1836 = vlaneseq
        %v1837 = vshrl.u32 %v1836, 7
        %v1838 = vsub.s32 0, %v1837
        %v1839 = vrot.slane %v1834, %v1838
        %v1840 = vlaneseq
        %v1841 = vshrl.u32 %v1840, 7
        %v1842 = vsub.s32 1, %v1841
        %v1843 = vrot.slane %v1834, %v1842
        %v1846 = vadd.f32 %v1802, %v1839
        %v1847 = vadd.f32 %v1803, %v1843
        %v1848 = vadd.f32 %v1804, %v1839
        %v1849 = vadd.f32 %v1805, %v1843
        %v1850 = vadd.f32 %v1806, %v1839
        %v1851 = vadd.f32 %v1807, %v1843
        %v1852 = vadd.f32 %v1808, %v1839
        %v1853 = vadd.f32 %v1809, %v1843
        %v1854 = vadd.f32 %v1810, %v1839
        %v1855 = vadd.f32 %v1811, %v1843
        %v1856 = vadd.f32 %v1812, %v1839
        %v1857 = vadd.f32 %v1813, %v1843
        %v1858 = vadd.f32 %v1814, %v1839
        %v1859 = vadd.f32 %v1815, %v1843
        %v1860 = vadd.f32 %v1816, %v1839
        %v1861 = vadd.f32 %v1817, %v1843
        %v1862 = vadd.f32 %v1818, %v1839
        %v1863 = vadd.f32 %v1819, %v1843
        %v1864 = vadd.f32 %v1820, %v1839
        %v1865 = vadd.f32 %v1821, %v1843
        %v1866 = vadd.f32 %v1822, %v1839
        %v1867 = vadd.f32 %v1823, %v1843
        %v1868 = vadd.f32 %v1824, %v1839
        %v1869 = vadd.f32 %v1825, %v1843
        %v1870 = vadd.f32 %v1826, %v1839
        %v1871 = vadd.f32 %v1827, %v1843
        %v1872 = vadd.f32 %v1828, %v1839
        %v1873 = vadd.f32 %v1829, %v1843
        %v1874 = vadd.f32 %v1830, %v1839
        %v1875 = vadd.f32 %v1831, %v1843
        %v1876 = vadd.f32 %v1832, %v1839
        %v1877 = vadd.f32 %v1833, %v1843
        %1878 = vst [vmem:[%s285] sm:$0xff] %v1846
        %1879 = vst [vmem:[%s285 + $0x8] sm:$0xff] %v1847
        %1880 = vst [vmem:[%s285 + $0x10] sm:$0xff] %v1848
        %1881 = vst [vmem:[%s285 + $0x18] sm:$0xff] %v1849
        %1882 = vst [vmem:[%s285 + $0x20] sm:$0xff] %v1850
        %1883 = vst [vmem:[%s285 + $0x28] sm:$0xff] %v1851
        %1884 = vst [vmem:[%s285 + $0x30] sm:$0xff] %v1852
        %1885 = vst [vmem:[%s285 + $0x38] sm:$0xff] %v1853
        %1886 = vst [vmem:[%s285 + $0x40] sm:$0xff] %v1854
        %1887 = vst [vmem:[%s285 + $0x48] sm:$0xff] %v1855
        %1888 = vst [vmem:[%s285 + $0x50] sm:$0xff] %v1856
        %1889 = vst [vmem:[%s285 + $0x58] sm:$0xff] %v1857
        %1890 = vst [vmem:[%s285 + $0x60] sm:$0xff] %v1858
        %1891 = vst [vmem:[%s285 + $0x68] sm:$0xff] %v1859
        %1892 = vst [vmem:[%s285 + $0x70] sm:$0xff] %v1860
        %1893 = vst [vmem:[%s285 + $0x78] sm:$0xff] %v1861
        %1894 = vst [vmem:[%s285 + $0x80] sm:$0xff] %v1862
        %1895 = vst [vmem:[%s285 + $0x88] sm:$0xff] %v1863
        %1896 = vst [vmem:[%s285 + $0x90] sm:$0xff] %v1864
        %1897 = vst [vmem:[%s285 + $0x98] sm:$0xff] %v1865
        %1898 = vst [vmem:[%s285 + $0xa0] sm:$0xff] %v1866
        %1899 = vst [vmem:[%s285 + $0xa8] sm:$0xff] %v1867
        %1900 = vst [vmem:[%s285 + $0xb0] sm:$0xff] %v1868
        %1901 = vst [vmem:[%s285 + $0xb8] sm:$0xff] %v1869
        %1902 = vst [vmem:[%s285 + $0xc0] sm:$0xff] %v1870
        %1903 = vst [vmem:[%s285 + $0xc8] sm:$0xff] %v1871
        %1904 = vst [vmem:[%s285 + $0xd0] sm:$0xff] %v1872
        %1905 = vst [vmem:[%s285 + $0xd8] sm:$0xff] %v1873
        %1906 = vst [vmem:[%s285 + $0xe0] sm:$0xff] %v1874
        %1907 = vst [vmem:[%s285 + $0xe8] sm:$0xff] %v1875
        %1908 = vst [vmem:[%s285 + $0xf0] sm:$0xff] %v1876
        %1909 = vst [vmem:[%s285 + $0xf8] sm:$0xff] %v1877
        %s1910 = sand.u32 %s142, 1
        %s1911 = scalar_lea.sflag [#allocation5], %s1910
        %s1912 = sand.u32 %s142, 1
        %s1913 = smul.addr %s1912, 256
        %s1914 = scalar_lea.vmem [#allocation11], %s1913
        // Predicated region
        $region57: #{tpu_custom_call.1} parent=39 // pred_check
          %p1915 = pneg %p152
        $region58: #{tpu_custom_call.1} parent=39 // pred_check_branch
          %1917 = sbr.rel (%p1915) target = $region60
        $region59: #{tpu_custom_call.1} parent=39 // pred_region
          %s1918 = smul.u32 16, %s24
          %s1920 = ssub.s32 4096, 4096
          %1921 = vsyncadd %s1911, %s1920
          %s1922 = smul.addr %s1918, 2
          %s1923 = smul.addr %s1922, 128
          %s1924 = scalar_lea.hbm %s5, %s1923
          %s1925 = sshll.u32 %s1914, 4
          %s1926 = int_to_ptr.vmem [resolvable:$true] %s1925
          %1931 = dma.vmem_to_hbm [thread:$0]  %s1926, 4096, %s1924, %s1911, 256, 256, 16
        $region60: #{tpu_custom_call.1} parent=39 // pred_fallthru
          _
      $region40: #{tpu_custom_call.1} parent=5 // pred_fallthru
        _
      %p1932 = scmp.le.s32.totalorder 2, %s19
      // Predicated region
      $region61: #{tpu_custom_call.1} parent=5 // pred_check
        %p1933 = pneg %p1932
      $region62: #{tpu_custom_call.1} parent=5 // pred_check_branch
        %1935 = sbr.rel (%p1933) target = $region64
      $region63: #{tpu_custom_call.1} parent=5 // pred_region
        %s1936 = ssub.s32 %s19, 2
        // Predicated region
        $region65: #{tpu_custom_call.1} parent=63 // pred_check
          %p1937 = pneg %p158
        $region66: #{tpu_custom_call.1} parent=63 // pred_check_branch
          %1939 = sbr.rel (%p1937) target = $region68
        $region67: #{tpu_custom_call.1} parent=63 // pred_region
          %s1940 = sand.u32 %s143, 1
          %s1941 = scalar_lea.sflag [#allocation5], %s1940
          %s1942 = sand.u32 %s143, 1
          %s1943 = smul.addr %s1942, 256
          %s1944 = scalar_lea.vmem [#allocation11], %s1943
          %1945 = dma.done %s1941, 4096
        $region68: #{tpu_custom_call.1} parent=63 // pred_fallthru
          _
      $region64: #{tpu_custom_call.1} parent=5 // pred_fallthru
        _
    $region6: #{tpu_custom_call.1} parent=1 // loop_footer
      %s23 = sadd.s32 1, %s19
    $region7: #{tpu_custom_call.1} parent=1 // loop_footer_branch
      %18 = sbr.rel target = $region3
    $region8: #{tpu_custom_call.1} parent=1 // loop_exit
      _
    %1946 = vsyncpa [#allocation4], 1
    %s1947 = scalar_lea.sflag [#allocation4], 1
    %1948 = vsyncpa %s1947, 1
    %1949 = vsyncpa [#allocation7], 1
    %1950 = vsyncpa [#allocation10], 1
    %1951 = vsyncpa [#allocation5], 1
    %s1952 = scalar_lea.sflag [#allocation5], 1
    %1953 = vsyncpa %s1952, 1

</llo_original>
